<compile_context>
chip_gen: v7x
topology: tpu7x:2x2x1
jax: 0.10.0
libtpu: 0.0.40
codegen_flags: <defaults>
</compile_context>

<pallas_src>
import functools
import math

import jax
import jax.numpy as jnp
from jax.experimental import pallas as pl
from jax.experimental.pallas import tpu as pltpu

ACT_DTYPE = jnp.bfloat16          # MXU operand / activation storage dtype
LOG2E = 1.4426950408889634


# ------------------------- per-generation tiling ---------------------------

def _chip_config():
    vmem_cap = None
    try:
        vmem_cap = int(pltpu.get_tpu_info().vmem_capacity_bytes)
    except Exception:
        vmem_cap = None
    if vmem_cap is None:
        kind = ""
        try:
            kind = jax.devices()[0].device_kind.lower()
        except Exception:
            pass
        if "v7" in kind:
            vmem_cap = 64 * 1024 * 1024
        elif "tpu" in kind:
            vmem_cap = 128 * 1024 * 1024
        else:
            vmem_cap = 64 * 1024 * 1024    # interpret / unknown: conservative
    if vmem_cap <= 64 * 1024 * 1024:
        # v7x: 64 MiB/TC -> smaller cap; tm=512 keeps enough parallel M-steps
        # for the 2 TensorCores on the fused-LN GEMMs (single parallel axis).
        return dict(tm=512, tn=512, tk=1024, vmem=40 * 1024 * 1024)
    # v5e / v6e: 128 MiB VMEM -> deepest reuse (v5e is the most HBM-starved).
    return dict(tm=1024, tn=512, tk=1024,
                vmem=min(96 * 1024 * 1024, vmem_cap - 32 * 1024 * 1024))


_CFG = _chip_config()
TM, TN, TK = _CFG["tm"], _CFG["tn"], _CFG["tk"]
VMEM_LIMIT = _CFG["vmem"]


def _pick_tile(dim, target, align):
    """Largest tile <= target that is a multiple of `align` and divides `dim`.
    If none exists, take the *smallest* aligned divisor above target (rather
    than silently jumping to the full dim and blowing the VMEM budget)."""
    if dim <= target:
        return dim
    t = (target // align) * align
    while t >= align:
        if dim % t == 0:
            return t
        t -= align
    t = ((target // align) + 1) * align
    while t < dim:
        if dim % t == 0:
            return t
        t += align
    return dim


def _compiler_params(sem):
    return pltpu.CompilerParams(dimension_semantics=sem,
                                vmem_limit_bytes=VMEM_LIMIT)


# ----------------------------- tiled matmul -------------------------------

def _matmul_kernel(x_ref, w_ref, b_ref, o_ref, acc_ref, *, activation):
    @pl.when(pl.program_id(2) == 0)
    def _init():
        acc_ref[...] = jnp.zeros_like(acc_ref)

    acc_ref[...] += jnp.dot(x_ref[...], w_ref[...],
                            preferred_element_type=jnp.float32)

    @pl.when(pl.program_id(2) == pl.num_programs(2) - 1)
    def _fin():
        y = acc_ref[...] + b_ref[...].astype(jnp.float32)
        if activation == "gelu":
            # tanh-approx GELU (HF uses erf-GELU; numerically very close).
            y = 0.5 * y * (1.0 + jnp.tanh(
                0.7978845608028654 * (y + 0.044715 * y * y * y)))
        o_ref[...] = y.astype(o_ref.dtype)


def linear(x, w, b, activation=None, out_dtype=None, tm=TM, tn=TN, tk=TK):
    """y = x @ w + b (optionally fused activation). x:[M,K], w:[K,N], b:[N]."""
    M, K = x.shape
    N = w.shape[1]
    out_dtype = out_dtype or x.dtype
    tm = _pick_tile(M, tm, 16)
    tn = _pick_tile(N, tn, 128)
    tk = _pick_tile(K, tk, 128)
    grid = (M // tm, N // tn, K // tk)
    return pl.pallas_call(
        functools.partial(_matmul_kernel, activation=activation),
        out_shape=jax.ShapeDtypeStruct((M, N), out_dtype),
        grid_spec=pltpu.PrefetchScalarGridSpec(
            num_scalar_prefetch=0, grid=grid,
            in_specs=[
                pl.BlockSpec((tm, tk), lambda i, j, k: (i, k)),
                pl.BlockSpec((tk, tn), lambda i, j, k: (k, j)),
                pl.BlockSpec((1, tn), lambda i, j, k: (0, j)),
            ],
            out_specs=pl.BlockSpec((tm, tn), lambda i, j, k: (i, j)),
            scratch_shapes=[pltpu.VMEM((tm, tn), jnp.float32)]),
        compiler_params=_compiler_params(("parallel", "parallel", "arbitrary")),
    )(x, w, b.reshape(1, N))


# --------------- matmul with fused residual-add + LayerNorm ----------------

def _matmul_add_ln_kernel(x_ref, w_ref, b_ref, r_ref, g_ref, bt_ref,
                          o_ref, acc_ref, *, eps):
    @pl.when(pl.program_id(1) == 0)
    def _init():
        acc_ref[...] = jnp.zeros_like(acc_ref)

    acc_ref[...] += jnp.dot(x_ref[...], w_ref[...],
                            preferred_element_type=jnp.float32)

    @pl.when(pl.program_id(1) == pl.num_programs(1) - 1)
    def _fin():
        y = (acc_ref[...] + b_ref[...].astype(jnp.float32)
             + r_ref[...].astype(jnp.float32))
        mu = jnp.mean(y, axis=-1, keepdims=True)
        var = jnp.mean(jnp.square(y - mu), axis=-1, keepdims=True)
        y = (y - mu) * jax.lax.rsqrt(var + eps)
        y = y * g_ref[...].astype(jnp.float32) + bt_ref[...].astype(jnp.float32)
        o_ref[...] = y.astype(o_ref.dtype)


def linear_add_layernorm(x, w, b, residual, gamma, beta, eps=1e-5,
                         out_dtype=None, tm=TM, tk=TK):
    """LayerNorm(x @ w + b + residual). Output block spans the full feature
    axis (required for the row-wise norm)."""
    M, K = x.shape
    N = w.shape[1]
    out_dtype = out_dtype or x.dtype
    tm = _pick_tile(M, tm, 16)
    tk = _pick_tile(K, tk, 128)
    grid = (M // tm, K // tk)
    return pl.pallas_call(
        functools.partial(_matmul_add_ln_kernel, eps=eps),
        out_shape=jax.ShapeDtypeStruct((M, N), out_dtype),
        grid_spec=pltpu.PrefetchScalarGridSpec(
            num_scalar_prefetch=0, grid=grid,
            in_specs=[
                pl.BlockSpec((tm, tk), lambda i, k: (i, k)),
                pl.BlockSpec((tk, N), lambda i, k: (k, 0)),
                pl.BlockSpec((1, N), lambda i, k: (0, 0)),
                pl.BlockSpec((tm, N), lambda i, k: (i, 0)),
                pl.BlockSpec((1, N), lambda i, k: (0, 0)),
                pl.BlockSpec((1, N), lambda i, k: (0, 0)),
            ],
            out_specs=pl.BlockSpec((tm, N), lambda i, k: (i, 0)),
            scratch_shapes=[pltpu.VMEM((tm, N), jnp.float32)]),
        compiler_params=_compiler_params(("parallel", "arbitrary")),
    )(x, w, b.reshape(1, N), residual, gamma.reshape(1, N), beta.reshape(1, N))


# -------------- embeddings: fused 3-way add + LayerNorm --------------------

def _embed_ln_kernel(w_ref, p_ref, t_ref, g_ref, b_ref, o_ref, *, eps):
    x = (w_ref[...].astype(jnp.float32) + p_ref[...].astype(jnp.float32)
         + t_ref[...].astype(jnp.float32))
    mu = jnp.mean(x, axis=-1, keepdims=True)
    var = jnp.mean(jnp.square(x - mu), axis=-1, keepdims=True)
    y = (x - mu) * jax.lax.rsqrt(var + eps)
    y = y * g_ref[...].astype(jnp.float32) + b_ref[...].astype(jnp.float32)
    o_ref[...] = y.astype(o_ref.dtype)


def embed_layernorm(word_rows, pos_rows, type_row, gamma, beta,
                    eps=1e-5, out_dtype=ACT_DTYPE, tm=512):
    """LayerNorm(word_rows + pos_rows + type_row). Rows are bf16 gathers."""
    M, H = word_rows.shape
    tm = _pick_tile(M, tm, 16)
    grid = (M // tm,)
    return pl.pallas_call(
        functools.partial(_embed_ln_kernel, eps=eps),
        out_shape=jax.ShapeDtypeStruct((M, H), out_dtype),
        grid_spec=pltpu.PrefetchScalarGridSpec(
            num_scalar_prefetch=0, grid=grid,
            in_specs=[
                pl.BlockSpec((tm, H), lambda i: (i, 0)),
                pl.BlockSpec((tm, H), lambda i: (i, 0)),
                pl.BlockSpec((1, H), lambda i: (0, 0)),
                pl.BlockSpec((1, H), lambda i: (0, 0)),
                pl.BlockSpec((1, H), lambda i: (0, 0)),
            ],
            out_specs=pl.BlockSpec((tm, H), lambda i: (i, 0))),
        compiler_params=_compiler_params(("parallel",)),
    )(word_rows, pos_rows, type_row, gamma.reshape(1, H), beta.reshape(1, H))


# ------------------------------ attention ----------------------------------
# QA sequence lengths are small (S <= 512-1024): whole K/V for a head group
# fits in VMEM, so we use a single KV step (no online softmax / m-l scratch).
# Heads are processed in groups of `hg` so each Q/K/V/out block is 128 lanes
# wide (lane-dense, half the grid steps for dh=64), and Q/K/V stay in the
# [B,S,H] projection layout (no HBM transposes).

def _heads_per_group(n_heads, dh):
    if dh % 128 == 0:
        return 1
    for hg in range(1, n_heads + 1):
        if n_heads % hg == 0 and (hg * dh) % 128 == 0:
            return hg
    return n_heads   # full-H block (always a legal last-dim block)


def _attention_kernel(q_ref, k_ref, v_ref, bias_ref, o_ref, *, dh, hg, scale):
    bias = bias_ref[0]                                 # (1, S) f32, additive
    qg = q_ref[0]                                      # (S, hg*dh) bf16
    kg = k_ref[0]
    vg = v_ref[0]
    outs = []
    for h in range(hg):                                # static unroll
        lo = h * dh
        q = jax.lax.slice_in_dim(qg, lo, lo + dh, axis=1)
        kh = jax.lax.slice_in_dim(kg, lo, lo + dh, axis=1)
        vh = jax.lax.slice_in_dim(vg, lo, lo + dh, axis=1)
        # scores via the MXU bf16 path, f32 accumulation
        s = jax.lax.dot_general(q, kh, (((1,), (1,)), ((), ())),
                                preferred_element_type=jnp.float32)
        s = s * scale + bias                           # log2-domain logits
        m = jnp.max(s, axis=-1, keepdims=True)
        p = jnp.exp2(s - m)                            # exp2: log2(e) folded in
        l = jnp.sum(p, axis=-1, keepdims=True)
        o = jnp.dot(p.astype(vh.dtype), vh, preferred_element_type=jnp.float32)
        outs.append(o * pl.reciprocal(l, approx=True))
    out = outs[0] if hg == 1 else jnp.concatenate(outs, axis=-1)
    o_ref[0] = out.astype(o_ref.dtype)


def attention(q, k, v, bias, n_heads, dh, *, out_dtype=None):
    """q/k/v: [B, S, H] (H = n_heads*dh).  bias: [B, 1, S] additive mask bias
    (already scaled for exp2 masking).  Returns context [B, S, H]."""
    B, S, H = q.shape
    out_dtype = out_dtype or q.dtype
    hg = _heads_per_group(n_heads, dh)
    G = hg * dh
    ng = n_heads // hg
    scale = LOG2E / math.sqrt(dh)
    grid = (B, ng)
    return pl.pallas_call(
        functools.partial(_attention_kernel, dh=dh, hg=hg, scale=scale),
        out_shape=jax.ShapeDtypeStruct((B, S, H), out_dtype),
        grid_spec=pltpu.PrefetchScalarGridSpec(
            num_scalar_prefetch=0, grid=grid,
            in_specs=[
                pl.BlockSpec((1, S, G), lambda b, g: (b, 0, g)),
                pl.BlockSpec((1, S, G), lambda b, g: (b, 0, g)),
                pl.BlockSpec((1, S, G), lambda b, g: (b, 0, g)),
                pl.BlockSpec((1, 1, S), lambda b, g: (b, 0, 0)),
            ],
            out_specs=pl.BlockSpec((1, S, G), lambda b, g: (b, 0, g))),
        compiler_params=_compiler_params(("parallel", "parallel")),
    )(q, k, v, bias)


# --------------------------- parameter creation ----------------------------

def init_params(key, *, vocab, hidden, n_heads, intermediate, n_layers,
                max_pos, initializer_range=0.02, dtype=ACT_DTYPE):
    del n_heads  # head count only affects runtime slicing
    keys = iter(jax.random.split(key, 4 + 6 * n_layers))
    std = initializer_range

    def nrm(shape, dt=dtype):
        return (jax.random.normal(next(keys), shape, jnp.float32) * std).astype(dt)

    # qa_outputs: weight ~ N(0, std), bias = 0 (matches _init_weights).
    # Zero-pad the 2-wide head to 128 lanes for dense stores; slice outside.
    qa_w = jax.random.normal(next(keys), (hidden, 2), jnp.float32) * std
    params = {
        # embedding tables in bf16 (halves gather bandwidth / footprint)
        "word_emb": nrm((vocab, hidden)),
        "pos_emb": nrm((max_pos, hidden)),
        "type_emb": nrm((1, hidden)),
        "emb_ln_g": jnp.ones((hidden,), jnp.float32),
        "emb_ln_b": jnp.zeros((hidden,), jnp.float32),
        "qa_w_pad": jnp.pad(qa_w, ((0, 0), (0, 126))).astype(dtype),
        "qa_b_pad": jnp.zeros((128,), jnp.float32),
        "layers": [],
    }
    for _ in range(n_layers):
        params["layers"].append({
            "wq": nrm((hidden, hidden)), "bq": jnp.zeros((hidden,), jnp.float32),
            "wk": nrm((hidden, hidden)), "bk": jnp.zeros((hidden,), jnp.float32),
            "wv": nrm((hidden, hidden)), "bv": jnp.zeros((hidden,), jnp.float32),
            "wo": nrm((hidden, hidden)), "bo": jnp.zeros((hidden,), jnp.float32),
            "ln1_g": jnp.ones((hidden,), jnp.float32),
            "ln1_b": jnp.zeros((hidden,), jnp.float32),
            "w1": nrm((hidden, intermediate)),
            "b1": jnp.zeros((intermediate,), jnp.float32),
            "w2": nrm((intermediate, hidden)),
            "b2": jnp.zeros((hidden,), jnp.float32),
            "ln2_g": jnp.ones((hidden,), jnp.float32),
            "ln2_b": jnp.zeros((hidden,), jnp.float32),
        })
    return params


# ------------------------------ forward pass -------------------------------

def model_forward(params, ids, mask=None, *, n_heads, padding_idx=1, eps=1e-5):
    B, S = ids.shape
    H = params["word_emb"].shape[1]
    dh = H // n_heads
    if mask is None:
        mask = jnp.ones((B, S), jnp.float32)

    # --- embeddings (gathers are plain-JAX glue; add+LayerNorm in Pallas) ---
    # RoBERTa position ids: cumulative count over non-pad tokens, offset by
    # padding_idx (create_position_ids_from_input_ids semantics).
    tok_mask = (ids != padding_idx).astype(jnp.int32)
    positions = jnp.cumsum(tok_mask, axis=1) * tok_mask + padding_idx
    word_rows = params["word_emb"][ids].reshape(B * S, H)
    pos_rows = params["pos_emb"][positions].reshape(B * S, H)
    x2d = embed_layernorm(word_rows, pos_rows, params["type_emb"],
                          params["emb_ln_g"], params["emb_ln_b"],
                          eps=eps, out_dtype=ACT_DTYPE)

    # additive attention-mask bias, computed ONCE per forward (huge negative
    # value works unchanged in the exp2 log-domain used by the kernel).
    bias = ((mask.astype(jnp.float32) - 1.0) * 1e9).reshape(B, 1, S)

    # --- encoder layers ---
    for lp in params["layers"]:
        # Q/K/V projections; [B*S,H] -> [B,S,H] is a free contiguous reshape
        # (no HBM transpose round-trips around attention).
        q = linear(x2d, lp["wq"], lp["bq"], out_dtype=ACT_DTYPE).reshape(B, S, H)
        k = linear(x2d, lp["wk"], lp["bk"], out_dtype=ACT_DTYPE).reshape(B, S, H)
        v = linear(x2d, lp["wv"], lp["bv"], out_dtype=ACT_DTYPE).reshape(B, S, H)
        ctx = attention(q, k, v, bias, n_heads, dh, out_dtype=ACT_DTYPE)
        ctx2d = ctx.reshape(B * S, H)
        # attn output projection fused with residual-add + LayerNorm
        x2d = linear_add_layernorm(ctx2d, lp["wo"], lp["bo"], x2d,
                                   lp["ln1_g"], lp["ln1_b"], eps=eps,
                                   out_dtype=ACT_DTYPE)
        # FFN: up-proj + GELU, then down-proj fused with residual + LayerNorm
        h_ff = linear(x2d, lp["w1"], lp["b1"], activation="gelu",
                      out_dtype=ACT_DTYPE)
        x2d = linear_add_layernorm(h_ff, lp["w2"], lp["b2"], x2d,
                                   lp["ln2_g"], lp["ln2_b"], eps=eps,
                                   out_dtype=ACT_DTYPE)

    sequence_output = x2d                                      # [B*S, H]
    # NOTE: the HF pooler output is never used by the torch forward(); it is
    # intentionally not computed here.

    # --- QA head: lane-dense padded Linear(H, 128); keep columns 0/1 ---
    qa_logits = linear(sequence_output, params["qa_w_pad"], params["qa_b_pad"],
                       out_dtype=jnp.float32)                  # [B*S, 128]
    qa_logits = qa_logits[:, :2].reshape(B, S, 2)
    start_logits = qa_logits[..., 0]
    end_logits = qa_logits[..., 1]
    return start_logits, end_logits


# ---------------------------------- main -----------------------------------

if __name__ == "__main__":
    # small synthetic config
    B, S = 2, 8
    VOCAB, H, NH, INTER, LAYERS = 100, 32, 2, 64, 2
    MAX_POS = S + 4

    key = jax.random.PRNGKey(0)
    pkey, ikey = jax.random.split(key)

    params = init_params(pkey, vocab=VOCAB, hidden=H, n_heads=NH,
                         intermediate=INTER, n_layers=LAYERS, max_pos=MAX_POS)

    ids = jax.random.randint(ikey, (B, S), 2, VOCAB, dtype=jnp.int32)
    mask = jnp.ones((B, S), jnp.float32).at[1, S - 2:].set(0.0)  # pad tail

    fwd = jax.jit(functools.partial(model_forward, n_heads=NH))
    start_logits, end_logits = fwd(params, ids, mask)
    jax.block_until_ready((start_logits, end_logits))

    assert start_logits.shape == (B, S) and end_logits.shape == (B, S)
    assert bool(jnp.all(jnp.isfinite(start_logits)))
    assert bool(jnp.all(jnp.isfinite(end_logits)))
    print("KERNEL_OK")
</pallas_src>

<mosaic_0001>
module attributes {stable_mosaic.version = 11 : i64} {
  func.func @_embed_ln_kernel(%arg0: i32, %arg1: memref<16x32xbf16, #tpu.memory_space<vmem>>, %arg2: memref<16x32xbf16, #tpu.memory_space<vmem>>, %arg3: memref<1x32xbf16, #tpu.memory_space<vmem>>, %arg4: memref<1x32xf32, #tpu.memory_space<vmem>>, %arg5: memref<1x32xf32, #tpu.memory_space<vmem>>, %arg6: memref<16x32xbf16, #tpu.memory_space<vmem>>) attributes {dimension_semantics = [#tpu.dimension_semantics<parallel>], iteration_bounds = array<i64: 1>, scalar_prefetch = 0 : i64, scratch_operands = 0 : i64, tpu.core_type = #tpu.core_type<tc>, window_params = [{transform_indices = @transform_0, window_bounds = array<i64: 16, 32>}, {transform_indices = @transform_1, window_bounds = array<i64: 16, 32>}, {pipeline_mode = #tpu.pipeline_mode<synchronous>, transform_indices = @transform_2, window_bounds = array<i64: 1, 32>}, {pipeline_mode = #tpu.pipeline_mode<synchronous>, transform_indices = @transform_3, window_bounds = array<i64: 1, 32>}, {pipeline_mode = #tpu.pipeline_mode<synchronous>, transform_indices = @transform_4, window_bounds = array<i64: 1, 32>}, {transform_indices = @transform_5, window_bounds = array<i64: 16, 32>}]} {
    %c0 = arith.constant 0 : index
    %c0_0 = arith.constant 0 : index
    %0 = vector.load %arg1[%c0, %c0_0] : memref<16x32xbf16, #tpu.memory_space<vmem>>, vector<16x32xbf16>
    %1 = arith.extf %0 : vector<16x32xbf16> to vector<16x32xf32>
    %c0_1 = arith.constant 0 : index
    %c0_2 = arith.constant 0 : index
    %2 = vector.load %arg2[%c0_1, %c0_2] : memref<16x32xbf16, #tpu.memory_space<vmem>>, vector<16x32xbf16>
    %3 = arith.extf %2 : vector<16x32xbf16> to vector<16x32xf32>
    %4 = arith.addf %1, %3 : vector<16x32xf32>
    %c0_3 = arith.constant 0 : index
    %c0_4 = arith.constant 0 : index
    %5 = vector.load %arg3[%c0_3, %c0_4] : memref<1x32xbf16, #tpu.memory_space<vmem>>, vector<1x32xbf16>
    %6 = arith.extf %5 : vector<1x32xbf16> to vector<1x32xf32>
    %7 = vector.broadcast %6 : vector<1x32xf32> to vector<16x32xf32>
    %8 = arith.addf %4, %7 : vector<16x32xf32>
    %cst = arith.constant dense<0.000000e+00> : vector<16xf32>
    %9 = vector.multi_reduction <add>, %8, %cst [1] : vector<16x32xf32> to vector<16xf32>
    %10 = vector.shape_cast %9 : vector<16xf32> to vector<16x1xf32>
    %cst_5 = arith.constant 3.200000e+01 : f32
    %11 = vector.broadcast %cst_5 : f32 to vector<16x1xf32>
    %12 = arith.divf %10, %11 : vector<16x1xf32>
    %13 = vector.broadcast %12 : vector<16x1xf32> to vector<16x32xf32>
    %14 = arith.subf %8, %13 : vector<16x32xf32>
    %15 = arith.mulf %14, %14 : vector<16x32xf32>
    %cst_6 = arith.constant dense<0.000000e+00> : vector<16xf32>
    %16 = vector.multi_reduction <add>, %15, %cst_6 [1] : vector<16x32xf32> to vector<16xf32>
    %17 = vector.shape_cast %16 : vector<16xf32> to vector<16x1xf32>
    %cst_7 = arith.constant 3.200000e+01 : f32
    %18 = vector.broadcast %cst_7 : f32 to vector<16x1xf32>
    %19 = arith.divf %17, %18 : vector<16x1xf32>
    %20 = vector.broadcast %12 : vector<16x1xf32> to vector<16x32xf32>
    %21 = arith.subf %8, %20 : vector<16x32xf32>
    %cst_8 = arith.constant 9.99999974E-6 : f32
    %22 = vector.broadcast %cst_8 : f32 to vector<16x1xf32>
    %23 = arith.addf %19, %22 : vector<16x1xf32>
    %24 = math.rsqrt %23 : vector<16x1xf32>
    %25 = vector.broadcast %24 : vector<16x1xf32> to vector<16x32xf32>
    %26 = arith.mulf %21, %25 : vector<16x32xf32>
    %c0_9 = arith.constant 0 : index
    %c0_10 = arith.constant 0 : index
    %27 = vector.load %arg4[%c0_9, %c0_10] : memref<1x32xf32, #tpu.memory_space<vmem>>, vector<1x32xf32>
    %28 = vector.broadcast %27 : vector<1x32xf32> to vector<16x32xf32>
    %29 = arith.mulf %26, %28 : vector<16x32xf32>
    %c0_11 = arith.constant 0 : index
    %c0_12 = arith.constant 0 : index
    %30 = vector.load %arg5[%c0_11, %c0_12] : memref<1x32xf32, #tpu.memory_space<vmem>>, vector<1x32xf32>
    %31 = vector.broadcast %30 : vector<1x32xf32> to vector<16x32xf32>
    %32 = arith.addf %29, %31 : vector<16x32xf32>
    %33 = arith.truncf %32 : vector<16x32xf32> to vector<16x32xbf16>
    %c0_13 = arith.constant 0 : index
    %c0_14 = arith.constant 0 : index
    %34 = vector.load %arg6[%c0_13, %c0_14] : memref<16x32xbf16, #tpu.memory_space<vmem>>, vector<16x32xbf16>
    tpu.vector_store %arg6[%c0_13, %c0_14], %33 {strides = array<i32>} : memref<16x32xbf16, #tpu.memory_space<vmem>>, vector<16x32xbf16>,
    return
  }
  func.func @transform_0(%arg0: i32) -> (i32, i32) {
    %c0_i32 = arith.constant 0 : i32
    %c0_i32_0 = arith.constant 0 : i32
    return %arg0, %c0_i32 : i32, i32
  }
  func.func @transform_1(%arg0: i32) -> (i32, i32) {
    %c0_i32 = arith.constant 0 : i32
    %c0_i32_0 = arith.constant 0 : i32
    return %arg0, %c0_i32 : i32, i32
  }
  func.func @transform_2(%arg0: i32) -> (i32, i32) {
    %c0_i32 = arith.constant 0 : i32
    %c0_i32_0 = arith.constant 0 : i32
    %c0_i32_1 = arith.constant 0 : i32
    return %c0_i32, %c0_i32_0 : i32, i32
  }
  func.func @transform_3(%arg0: i32) -> (i32, i32) {
    %c0_i32 = arith.constant 0 : i32
    %c0_i32_0 = arith.constant 0 : i32
    %c0_i32_1 = arith.constant 0 : i32
    return %c0_i32, %c0_i32_0 : i32, i32
  }
  func.func @transform_4(%arg0: i32) -> (i32, i32) {
    %c0_i32 = arith.constant 0 : i32
    %c0_i32_0 = arith.constant 0 : i32
    %c0_i32_1 = arith.constant 0 : i32
    return %c0_i32, %c0_i32_0 : i32, i32
  }
  func.func @transform_5(%arg0: i32) -> (i32, i32) {
    %c0_i32 = arith.constant 0 : i32
    %c0_i32_0 = arith.constant 0 : i32
    return %arg0, %c0_i32 : i32, i32
  }
}

module attributes {stable_mosaic.version = 11 : i64} {
  func.func @_matmul_kernel(%arg0: i32, %arg1: i32, %arg2: i32, %arg3: memref<16x32xbf16, #tpu.memory_space<vmem>>, %arg4: memref<32x32xbf16, #tpu.memory_space<vmem>>, %arg5: memref<1x32xf32, #tpu.memory_space<vmem>>, %arg6: memref<16x32xbf16, #tpu.memory_space<vmem>>, %arg7: memref<16x32xf32, #tpu.memory_space<vmem>>) attributes {dimension_semantics = [#tpu.dimension_semantics<parallel>, #tpu.dimension_semantics<parallel>, #tpu.dimension_semantics<arbitrary>], iteration_bounds = array<i64: 1, 1, 1>, scalar_prefetch = 0 : i64, scratch_operands = 1 : i64, tpu.core_type = #tpu.core_type<tc>, window_params = [{transform_indices = @transform_0, window_bounds = array<i64: 16, 32>}, {transform_indices = @transform_1, window_bounds = array<i64: 32, 32>}, {transform_indices = @transform_2, window_bounds = array<i64: 1, 32>}, {transform_indices = @transform_3, window_bounds = array<i64: 16, 32>}]} {
    %c0_i32 = arith.constant 0 : i32
    %0 = arith.cmpi eq, %arg2, %c0_i32 : i32
    %1 = arith.extui %0 : i1 to i32
    %c0_i32_0 = arith.constant 0 : i32
    %2 = arith.cmpi ne, %1, %c0_i32_0 : i32
    scf.if %2 {
      %cst_10 = arith.constant 0.000000e+00 : f32
      %12 = vector.broadcast %cst_10 : f32 to vector<16x32xf32>
      %c0_11 = arith.constant 0 : index
      %c0_12 = arith.constant 0 : index
      %13 = vector.load %arg7[%c0_11, %c0_12] : memref<16x32xf32, #tpu.memory_space<vmem>>, vector<16x32xf32>
      tpu.vector_store %arg7[%c0_11, %c0_12], %12 {strides = array<i32>} : memref<16x32xf32, #tpu.memory_space<vmem>>, vector<16x32xf32>,
    } else {
    }
    %c0 = arith.constant 0 : index
    %c0_1 = arith.constant 0 : index
    %3 = vector.load %arg7[%c0, %c0_1] : memref<16x32xf32, #tpu.memory_space<vmem>>, vector<16x32xf32>
    %c0_2 = arith.constant 0 : index
    %c0_3 = arith.constant 0 : index
    %4 = vector.load %arg3[%c0_2, %c0_3] : memref<16x32xbf16, #tpu.memory_space<vmem>>, vector<16x32xbf16>
    %c0_4 = arith.constant 0 : index
    %c0_5 = arith.constant 0 : index
    %5 = vector.load %arg4[%c0_4, %c0_5] : memref<32x32xbf16, #tpu.memory_space<vmem>>, vector<32x32xbf16>
    %cst = arith.constant dense<0.000000e+00> : vector<16x32xf32>
    %6 = tpu.matmul %4, %5, %cst {dimension_numbers = #tpu.dot_dimension_numbers<[1], [0], [0], [1], [0, 0, 1, 1], [], []>} : vector<16x32xbf16>, vector<32x32xbf16>, vector<16x32xf32> -> vector<16x32xf32>
    %7 = arith.addf %3, %6 : vector<16x32xf32>
    %c0_6 = arith.constant 0 : index
    %c0_7 = arith.constant 0 : index
    %8 = vector.load %arg7[%c0_6, %c0_7] : memref<16x32xf32, #tpu.memory_space<vmem>>, vector<16x32xf32>
    tpu.vector_store %arg7[%c0_6, %c0_7], %7 {strides = array<i32>} : memref<16x32xf32, #tpu.memory_space<vmem>>, vector<16x32xf32>,
    %c0_i32_8 = arith.constant 0 : i32
    %9 = arith.cmpi eq, %arg2, %c0_i32_8 : i32
    %10 = arith.extui %9 : i1 to i32
    %c0_i32_9 = arith.constant 0 : i32
    %11 = arith.cmpi ne, %10, %c0_i32_9 : i32
    scf.if %11 {
      %c0_10 = arith.constant 0 : index
      %c0_11 = arith.constant 0 : index
      %12 = vector.load %arg7[%c0_10, %c0_11] : memref<16x32xf32, #tpu.memory_space<vmem>>, vector<16x32xf32>
      %c0_12 = arith.constant 0 : index
      %c0_13 = arith.constant 0 : index
      %13 = vector.load %arg5[%c0_12, %c0_13] : memref<1x32xf32, #tpu.memory_space<vmem>>, vector<1x32xf32>
      %14 = vector.broadcast %13 : vector<1x32xf32> to vector<16x32xf32>
      %15 = arith.addf %12, %14 : vector<16x32xf32>
      %16 = arith.truncf %15 : vector<16x32xf32> to vector<16x32xbf16>
      %c0_14 = arith.constant 0 : index
      %c0_15 = arith.constant 0 : index
      %17 = vector.load %arg6[%c0_14, %c0_15] : memref<16x32xbf16, #tpu.memory_space<vmem>>, vector<16x32xbf16>
      tpu.vector_store %arg6[%c0_14, %c0_15], %16 {strides = array<i32>} : memref<16x32xbf16, #tpu.memory_space<vmem>>, vector<16x32xbf16>,
    } else {
    }
    return
  }
  func.func @transform_0(%arg0: i32, %arg1: i32, %arg2: i32) -> (i32, i32) {
    %c0_i32 = arith.constant 0 : i32
    return %arg0, %arg2 : i32, i32
  }
  func.func @transform_1(%arg0: i32, %arg1: i32, %arg2: i32) -> (i32, i32) {
    %c0_i32 = arith.constant 0 : i32
    return %arg2, %arg1 : i32, i32
  }
  func.func @transform_2(%arg0: i32, %arg1: i32, %arg2: i32) -> (i32, i32) {
    %c0_i32 = arith.constant 0 : i32
    %c0_i32_0 = arith.constant 0 : i32
    return %c0_i32, %arg1 : i32, i32
  }
  func.func @transform_3(%arg0: i32, %arg1: i32, %arg2: i32) -> (i32, i32) {
    %c0_i32 = arith.constant 0 : i32
    return %arg0, %arg1 : i32, i32
  }
}

module attributes {stable_mosaic.version = 11 : i64} {
  func.func @_matmul_add_ln_kernel(%arg0: i32, %arg1: i32, %arg2: memref<16x32xbf16, #tpu.memory_space<vmem>>, %arg3: memref<32x32xbf16, #tpu.memory_space<vmem>>, %arg4: memref<1x32xf32, #tpu.memory_space<vmem>>, %arg5: memref<16x32xbf16, #tpu.memory_space<vmem>>, %arg6: memref<1x32xf32, #tpu.memory_space<vmem>>, %arg7: memref<1x32xf32, #tpu.memory_space<vmem>>, %arg8: memref<16x32xbf16, #tpu.memory_space<vmem>>, %arg9: memref<16x32xf32, #tpu.memory_space<vmem>>) attributes {dimension_semantics = [#tpu.dimension_semantics<parallel>, #tpu.dimension_semantics<arbitrary>], iteration_bounds = array<i64: 1, 1>, scalar_prefetch = 0 : i64, scratch_operands = 1 : i64, tpu.core_type = #tpu.core_type<tc>, window_params = [{transform_indices = @transform_0, window_bounds = array<i64: 16, 32>}, {transform_indices = @transform_1, window_bounds = array<i64: 32, 32>}, {pipeline_mode = #tpu.pipeline_mode<synchronous>, transform_indices = @transform_2, window_bounds = array<i64: 1, 32>}, {transform_indices = @transform_3, window_bounds = array<i64: 16, 32>}, {pipeline_mode = #tpu.pipeline_mode<synchronous>, transform_indices = @transform_4, window_bounds = array<i64: 1, 32>}, {pipeline_mode = #tpu.pipeline_mode<synchronous>, transform_indices = @transform_5, window_bounds = array<i64: 1, 32>}, {transform_indices = @transform_6, window_bounds = array<i64: 16, 32>}]} {
    %c0_i32 = arith.constant 0 : i32
    %0 = arith.cmpi eq, %arg1, %c0_i32 : i32
    %1 = arith.extui %0 : i1 to i32
    %c0_i32_0 = arith.constant 0 : i32
    %2 = arith.cmpi ne, %1, %c0_i32_0 : i32
    scf.if %2 {
      %cst_10 = arith.constant 0.000000e+00 : f32
      %12 = vector.broadcast %cst_10 : f32 to vector<16x32xf32>
      %c0_11 = arith.constant 0 : index
      %c0_12 = arith.constant 0 : index
      %13 = vector.load %arg9[%c0_11, %c0_12] : memref<16x32xf32, #tpu.memory_space<vmem>>, vector<16x32xf32>
      tpu.vector_store %arg9[%c0_11, %c0_12], %12 {strides = array<i32>} : memref<16x32xf32, #tpu.memory_space<vmem>>, vector<16x32xf32>,
    } else {
    }
    %c0 = arith.constant 0 : index
    %c0_1 = arith.constant 0 : index
    %3 = vector.load %arg9[%c0, %c0_1] : memref<16x32xf32, #tpu.memory_space<vmem>>, vector<16x32xf32>
    %c0_2 = arith.constant 0 : index
    %c0_3 = arith.constant 0 : index
    %4 = vector.load %arg2[%c0_2, %c0_3] : memref<16x32xbf16, #tpu.memory_space<vmem>>, vector<16x32xbf16>
    %c0_4 = arith.constant 0 : index
    %c0_5 = arith.constant 0 : index
    %5 = vector.load %arg3[%c0_4, %c0_5] : memref<32x32xbf16, #tpu.memory_space<vmem>>, vector<32x32xbf16>
    %cst = arith.constant dense<0.000000e+00> : vector<16x32xf32>
    %6 = tpu.matmul %4, %5, %cst {dimension_numbers = #tpu.dot_dimension_numbers<[1], [0], [0], [1], [0, 0, 1, 1], [], []>} : vector<16x32xbf16>, vector<32x32xbf16>, vector<16x32xf32> -> vector<16x32xf32>
    %7 = arith.addf %3, %6 : vector<16x32xf32>
    %c0_6 = arith.constant 0 : index
    %c0_7 = arith.constant 0 : index
    %8 = vector.load %arg9[%c0_6, %c0_7] : memref<16x32xf32, #tpu.memory_space<vmem>>, vector<16x32xf32>
    tpu.vector_store %arg9[%c0_6, %c0_7], %7 {strides = array<i32>} : memref<16x32xf32, #tpu.memory_space<vmem>>, vector<16x32xf32>,
    %c0_i32_8 = arith.constant 0 : i32
    %9 = arith.cmpi eq, %arg1, %c0_i32_8 : i32
    %10 = arith.extui %9 : i1 to i32
    %c0_i32_9 = arith.constant 0 : i32
    %11 = arith.cmpi ne, %10, %c0_i32_9 : i32
    scf.if %11 {
      %c0_10 = arith.constant 0 : index
      %c0_11 = arith.constant 0 : index
      %12 = vector.load %arg9[%c0_10, %c0_11] : memref<16x32xf32, #tpu.memory_space<vmem>>, vector<16x32xf32>
      %c0_12 = arith.constant 0 : index
      %c0_13 = arith.constant 0 : index
      %13 = vector.load %arg4[%c0_12, %c0_13] : memref<1x32xf32, #tpu.memory_space<vmem>>, vector<1x32xf32>
      %14 = vector.broadcast %13 : vector<1x32xf32> to vector<16x32xf32>
      %15 = arith.addf %12, %14 : vector<16x32xf32>
      %c0_14 = arith.constant 0 : index
      %c0_15 = arith.constant 0 : index
      %16 = vector.load %arg5[%c0_14, %c0_15] : memref<16x32xbf16, #tpu.memory_space<vmem>>, vector<16x32xbf16>
      %17 = arith.extf %16 : vector<16x32xbf16> to vector<16x32xf32>
      %18 = arith.addf %15, %17 : vector<16x32xf32>
      %cst_16 = arith.constant dense<0.000000e+00> : vector<16xf32>
      %19 = vector.multi_reduction <add>, %18, %cst_16 [1] : vector<16x32xf32> to vector<16xf32>
      %20 = vector.shape_cast %19 : vector<16xf32> to vector<16x1xf32>
      %cst_17 = arith.constant 3.200000e+01 : f32
      %21 = vector.broadcast %cst_17 : f32 to vector<16x1xf32>
      %22 = arith.divf %20, %21 : vector<16x1xf32>
      %23 = vector.broadcast %22 : vector<16x1xf32> to vector<16x32xf32>
      %24 = arith.subf %18, %23 : vector<16x32xf32>
      %25 = arith.mulf %24, %24 : vector<16x32xf32>
      %cst_18 = arith.constant dense<0.000000e+00> : vector<16xf32>
      %26 = vector.multi_reduction <add>, %25, %cst_18 [1] : vector<16x32xf32> to vector<16xf32>
      %27 = vector.shape_cast %26 : vector<16xf32> to vector<16x1xf32>
      %cst_19 = arith.constant 3.200000e+01 : f32
      %28 = vector.broadcast %cst_19 : f32 to vector<16x1xf32>
      %29 = arith.divf %27, %28 : vector<16x1xf32>
      %30 = vector.broadcast %22 : vector<16x1xf32> to vector<16x32xf32>
      %31 = arith.subf %18, %30 : vector<16x32xf32>
      %cst_20 = arith.constant 9.99999974E-6 : f32
      %32 = vector.broadcast %cst_20 : f32 to vector<16x1xf32>
      %33 = arith.addf %29, %32 : vector<16x1xf32>
      %34 = math.rsqrt %33 : vector<16x1xf32>
      %35 = vector.broadcast %34 : vector<16x1xf32> to vector<16x32xf32>
      %36 = arith.mulf %31, %35 : vector<16x32xf32>
      %c0_21 = arith.constant 0 : index
      %c0_22 = arith.constant 0 : index
      %37 = vector.load %arg6[%c0_21, %c0_22] : memref<1x32xf32, #tpu.memory_space<vmem>>, vector<1x32xf32>
      %38 = vector.broadcast %37 : vector<1x32xf32> to vector<16x32xf32>
      %39 = arith.mulf %36, %38 : vector<16x32xf32>
      %c0_23 = arith.constant 0 : index
      %c0_24 = arith.constant 0 : index
      %40 = vector.load %arg7[%c0_23, %c0_24] : memref<1x32xf32, #tpu.memory_space<vmem>>, vector<1x32xf32>
      %41 = vector.broadcast %40 : vector<1x32xf32> to vector<16x32xf32>
      %42 = arith.addf %39, %41 : vector<16x32xf32>
      %43 = arith.truncf %42 : vector<16x32xf32> to vector<16x32xbf16>
      %c0_25 = arith.constant 0 : index
      %c0_26 = arith.constant 0 : index
      %44 = vector.load %arg8[%c0_25, %c0_26] : memref<16x32xbf16, #tpu.memory_space<vmem>>, vector<16x32xbf16>
      tpu.vector_store %arg8[%c0_25, %c0_26], %43 {strides = array<i32>} : memref<16x32xbf16, #tpu.memory_space<vmem>>, vector<16x32xbf16>,
    } else {
    }
    return
  }
  func.func @transform_0(%arg0: i32, %arg1: i32) -> (i32, i32) {
    %c0_i32 = arith.constant 0 : i32
    return %arg0, %arg1 : i32, i32
  }
  func.func @transform_1(%arg0: i32, %arg1: i32) -> (i32, i32) {
    %c0_i32 = arith.constant 0 : i32
    %c0_i32_0 = arith.constant 0 : i32
    return %arg1, %c0_i32 : i32, i32
  }
  func.func @transform_2(%arg0: i32, %arg1: i32) -> (i32, i32) {
    %c0_i32 = arith.constant 0 : i32
    %c0_i32_0 = arith.constant 0 : i32
    %c0_i32_1 = arith.constant 0 : i32
    return %c0_i32, %c0_i32_0 : i32, i32
  }
  func.func @transform_3(%arg0: i32, %arg1: i32) -> (i32, i32) {
    %c0_i32 = arith.constant 0 : i32
    %c0_i32_0 = arith.constant 0 : i32
    return %arg0, %c0_i32 : i32, i32
  }
  func.func @transform_4(%arg0: i32, %arg1: i32) -> (i32, i32) {
    %c0_i32 = arith.constant 0 : i32
    %c0_i32_0 = arith.constant 0 : i32
    %c0_i32_1 = arith.constant 0 : i32
    return %c0_i32, %c0_i32_0 : i32, i32
  }
  func.func @transform_5(%arg0: i32, %arg1: i32) -> (i32, i32) {
    %c0_i32 = arith.constant 0 : i32
    %c0_i32_0 = arith.constant 0 : i32
    %c0_i32_1 = arith.constant 0 : i32
    return %c0_i32, %c0_i32_0 : i32, i32
  }
  func.func @transform_6(%arg0: i32, %arg1: i32) -> (i32, i32) {
    %c0_i32 = arith.constant 0 : i32
    %c0_i32_0 = arith.constant 0 : i32
    return %arg0, %c0_i32 : i32, i32
  }
}

module attributes {stable_mosaic.version = 11 : i64} {
  func.func @_attention_kernel(%arg0: i32, %arg1: i32, %arg2: memref<1x8x32xbf16, #tpu.memory_space<vmem>>, %arg3: memref<1x8x32xbf16, #tpu.memory_space<vmem>>, %arg4: memref<1x8x32xbf16, #tpu.memory_space<vmem>>, %arg5: memref<1x1x8xf32, #tpu.memory_space<vmem>>, %arg6: memref<1x8x32xbf16, #tpu.memory_space<vmem>>) attributes {dimension_semantics = [#tpu.dimension_semantics<parallel>, #tpu.dimension_semantics<parallel>], iteration_bounds = array<i64: 2, 1>, scalar_prefetch = 0 : i64, scratch_operands = 0 : i64, tpu.core_type = #tpu.core_type<tc>, window_params = [{transform_indices = @transform_0, window_bounds = array<i64: 1, 8, 32>}, {transform_indices = @transform_1, window_bounds = array<i64: 1, 8, 32>}, {transform_indices = @transform_2, window_bounds = array<i64: 1, 8, 32>}, {transform_indices = @transform_3, window_bounds = array<i64: 1, 1, 8>}, {transform_indices = @transform_4, window_bounds = array<i64: 1, 8, 32>}]} {
    %c0 = arith.constant 0 : index
    %c0_0 = arith.constant 0 : index
    %c0_1 = arith.constant 0 : index
    %0 = vector.load %arg5[%c0, %c0_0, %c0_1] : memref<1x1x8xf32, #tpu.memory_space<vmem>>, vector<1x1x8xf32>
    %1 = vector.shape_cast %0 : vector<1x1x8xf32> to vector<1x8xf32>
    %c0_2 = arith.constant 0 : index
    %c0_3 = arith.constant 0 : index
    %c0_4 = arith.constant 0 : index
    %2 = vector.load %arg2[%c0_2, %c0_3, %c0_4] : memref<1x8x32xbf16, #tpu.memory_space<vmem>>, vector<1x8x32xbf16>
    %3 = vector.shape_cast %2 : vector<1x8x32xbf16> to vector<8x32xbf16>
    %c0_5 = arith.constant 0 : index
    %c0_6 = arith.constant 0 : index
    %c0_7 = arith.constant 0 : index
    %4 = vector.load %arg3[%c0_5, %c0_6, %c0_7] : memref<1x8x32xbf16, #tpu.memory_space<vmem>>, vector<1x8x32xbf16>
    %5 = vector.shape_cast %4 : vector<1x8x32xbf16> to vector<8x32xbf16>
    %c0_8 = arith.constant 0 : index
    %c0_9 = arith.constant 0 : index
    %c0_10 = arith.constant 0 : index
    %6 = vector.load %arg4[%c0_8, %c0_9, %c0_10] : memref<1x8x32xbf16, #tpu.memory_space<vmem>>, vector<1x8x32xbf16>
    %7 = vector.shape_cast %6 : vector<1x8x32xbf16> to vector<8x32xbf16>
    %8 = vector.extract_strided_slice %3 {offsets = [0, 0], sizes = [8, 16], strides = [1, 1]} : vector<8x32xbf16> to vector<8x16xbf16>
    %9 = vector.extract_strided_slice %5 {offsets = [0, 0], sizes = [8, 16], strides = [1, 1]} : vector<8x32xbf16> to vector<8x16xbf16>
    %10 = vector.extract_strided_slice %7 {offsets = [0, 0], sizes = [8, 16], strides = [1, 1]} : vector<8x32xbf16> to vector<8x16xbf16>
    %cst = arith.constant dense<0.000000e+00> : vector<8x8xf32>
    %11 = tpu.matmul %8, %9, %cst {dimension_numbers = #tpu.dot_dimension_numbers<[1], [1], [0], [0], [0, 0, 1, 0], [], []>} : vector<8x16xbf16>, vector<8x16xbf16>, vector<8x8xf32> -> vector<8x8xf32>
    %cst_11 = arith.constant 0.360673755 : f32
    %12 = vector.broadcast %cst_11 : f32 to vector<8x8xf32>
    %13 = arith.mulf %11, %12 : vector<8x8xf32>
    %14 = vector.broadcast %1 : vector<1x8xf32> to vector<8x8xf32>
    %15 = arith.addf %13, %14 : vector<8x8xf32>
    %cst_12 = arith.constant dense<0xFF800000> : vector<8xf32>
    %16 = vector.multi_reduction <maximumf>, %15, %cst_12 [1] : vector<8x8xf32> to vector<8xf32>
    %17 = vector.shape_cast %16 : vector<8xf32> to vector<8x1xf32>
    %18 = vector.broadcast %17 : vector<8x1xf32> to vector<8x8xf32>
    %19 = arith.subf %15, %18 : vector<8x8xf32>
    %20 = math.exp2 %19 : vector<8x8xf32>
    %cst_13 = arith.constant dense<0.000000e+00> : vector<8xf32>
    %21 = vector.multi_reduction <add>, %20, %cst_13 [1] : vector<8x8xf32> to vector<8xf32>
    %22 = vector.shape_cast %21 : vector<8xf32> to vector<8x1xf32>
    %23 = arith.truncf %20 : vector<8x8xf32> to vector<8x8xbf16>
    %cst_14 = arith.constant dense<0.000000e+00> : vector<8x16xf32>
    %24 = tpu.matmul %23, %10, %cst_14 {dimension_numbers = #tpu.dot_dimension_numbers<[1], [0], [0], [1], [0, 0, 1, 1], [], []>} : vector<8x8xbf16>, vector<8x16xbf16>, vector<8x16xf32> -> vector<8x16xf32>
    %25 = tpu.reciprocal %22 {approx = true} : vector<8x1xf32> -> vector<8x1xf32>
    %26 = vector.broadcast %25 : vector<8x1xf32> to vector<8x16xf32>
    %27 = arith.mulf %24, %26 : vector<8x16xf32>
    %28 = vector.extract_strided_slice %3 {offsets = [0, 16], sizes = [8, 16], strides = [1, 1]} : vector<8x32xbf16> to vector<8x16xbf16>
    %29 = vector.extract_strided_slice %5 {offsets = [0, 16], sizes = [8, 16], strides = [1, 1]} : vector<8x32xbf16> to vector<8x16xbf16>
    %30 = vector.extract_strided_slice %7 {offsets = [0, 16], sizes = [8, 16], strides = [1, 1]} : vector<8x32xbf16> to vector<8x16xbf16>
    %cst_15 = arith.constant dense<0.000000e+00> : vector<8x8xf32>
    %31 = tpu.matmul %28, %29, %cst_15 {dimension_numbers = #tpu.dot_dimension_numbers<[1], [1], [0], [0], [0, 0, 1, 0], [], []>} : vector<8x16xbf16>, vector<8x16xbf16>, vector<8x8xf32> -> vector<8x8xf32>
    %cst_16 = arith.constant 0.360673755 : f32
    %32 = vector.broadcast %cst_16 : f32 to vector<8x8xf32>
    %33 = arith.mulf %31, %32 : vector<8x8xf32>
    %34 = vector.broadcast %1 : vector<1x8xf32> to vector<8x8xf32>
    %35 = arith.addf %33, %34 : vector<8x8xf32>
    %cst_17 = arith.constant dense<0xFF800000> : vector<8xf32>
    %36 = vector.multi_reduction <maximumf>, %35, %cst_17 [1] : vector<8x8xf32> to vector<8xf32>
    %37 = vector.shape_cast %36 : vector<8xf32> to vector<8x1xf32>
    %38 = vector.broadcast %37 : vector<8x1xf32> to vector<8x8xf32>
    %39 = arith.subf %35, %38 : vector<8x8xf32>
    %40 = math.exp2 %39 : vector<8x8xf32>
    %cst_18 = arith.constant dense<0.000000e+00> : vector<8xf32>
    %41 = vector.multi_reduction <add>, %40, %cst_18 [1] : vector<8x8xf32> to vector<8xf32>
    %42 = vector.shape_cast %41 : vector<8xf32> to vector<8x1xf32>
    %43 = arith.truncf %40 : vector<8x8xf32> to vector<8x8xbf16>
    %cst_19 = arith.constant dense<0.000000e+00> : vector<8x16xf32>
    %44 = tpu.matmul %43, %30, %cst_19 {dimension_numbers = #tpu.dot_dimension_numbers<[1], [0], [0], [1], [0, 0, 1, 1], [], []>} : vector<8x8xbf16>, vector<8x16xbf16>, vector<8x16xf32> -> vector<8x16xf32>
    %45 = tpu.reciprocal %42 {approx = true} : vector<8x1xf32> -> vector<8x1xf32>
    %46 = vector.broadcast %45 : vector<8x1xf32> to vector<8x16xf32>
    %47 = arith.mulf %44, %46 : vector<8x16xf32>
    %48 = tpu.concatenate %27, %47 in 1 : vector<8x16xf32>, vector<8x16xf32> -> vector<8x32xf32>
    %49 = arith.truncf %48 : vector<8x32xf32> to vector<8x32xbf16>
    %c0_20 = arith.constant 0 : index
    %c0_21 = arith.constant 0 : index
    %c0_22 = arith.constant 0 : index
    %50 = vector.load %arg6[%c0_20, %c0_21, %c0_22] : memref<1x8x32xbf16, #tpu.memory_space<vmem>>, vector<1x8x32xbf16>
    %51 = vector.shape_cast %50 : vector<1x8x32xbf16> to vector<8x32xbf16>
    %52 = vector.shape_cast %49 : vector<8x32xbf16> to vector<1x8x32xbf16>
    tpu.vector_store %arg6[%c0_20, %c0_21, %c0_22], %52 {strides = array<i32>} : memref<1x8x32xbf16, #tpu.memory_space<vmem>>, vector<1x8x32xbf16>,
    return
  }
  func.func @transform_0(%arg0: i32, %arg1: i32) -> (i32, i32, i32) {
    %c0_i32 = arith.constant 0 : i32
    %c0_i32_0 = arith.constant 0 : i32
    return %arg0, %c0_i32, %arg1 : i32, i32, i32
  }
  func.func @transform_1(%arg0: i32, %arg1: i32) -> (i32, i32, i32) {
    %c0_i32 = arith.constant 0 : i32
    %c0_i32_0 = arith.constant 0 : i32
    return %arg0, %c0_i32, %arg1 : i32, i32, i32
  }
  func.func @transform_2(%arg0: i32, %arg1: i32) -> (i32, i32, i32) {
    %c0_i32 = arith.constant 0 : i32
    %c0_i32_0 = arith.constant 0 : i32
    return %arg0, %c0_i32, %arg1 : i32, i32, i32
  }
  func.func @transform_3(%arg0: i32, %arg1: i32) -> (i32, i32, i32) {
    %c0_i32 = arith.constant 0 : i32
    %c0_i32_0 = arith.constant 0 : i32
    %c0_i32_1 = arith.constant 0 : i32
    return %arg0, %c0_i32, %c0_i32_0 : i32, i32, i32
  }
  func.func @transform_4(%arg0: i32, %arg1: i32) -> (i32, i32, i32) {
    %c0_i32 = arith.constant 0 : i32
    %c0_i32_0 = arith.constant 0 : i32
    return %arg0, %c0_i32, %arg1 : i32, i32, i32
  }
}

module attributes {stable_mosaic.version = 11 : i64} {
  func.func @_matmul_kernel(%arg0: i32, %arg1: i32, %arg2: i32, %arg3: memref<16x32xbf16, #tpu.memory_space<vmem>>, %arg4: memref<32x64xbf16, #tpu.memory_space<vmem>>, %arg5: memref<1x64xf32, #tpu.memory_space<vmem>>, %arg6: memref<16x64xbf16, #tpu.memory_space<vmem>>, %arg7: memref<16x64xf32, #tpu.memory_space<vmem>>) attributes {dimension_semantics = [#tpu.dimension_semantics<parallel>, #tpu.dimension_semantics<parallel>, #tpu.dimension_semantics<arbitrary>], iteration_bounds = array<i64: 1, 1, 1>, scalar_prefetch = 0 : i64, scratch_operands = 1 : i64, tpu.core_type = #tpu.core_type<tc>, window_params = [{transform_indices = @transform_0, window_bounds = array<i64: 16, 32>}, {transform_indices = @transform_1, window_bounds = array<i64: 32, 64>}, {transform_indices = @transform_2, window_bounds = array<i64: 1, 64>}, {transform_indices = @transform_3, window_bounds = array<i64: 16, 64>}]} {
    %c0_i32 = arith.constant 0 : i32
    %0 = arith.cmpi eq, %arg2, %c0_i32 : i32
    %1 = arith.extui %0 : i1 to i32
    %c0_i32_0 = arith.constant 0 : i32
    %2 = arith.cmpi ne, %1, %c0_i32_0 : i32
    scf.if %2 {
      %cst_10 = arith.constant 0.000000e+00 : f32
      %12 = vector.broadcast %cst_10 : f32 to vector<16x64xf32>
      %c0_11 = arith.constant 0 : index
      %c0_12 = arith.constant 0 : index
      %13 = vector.load %arg7[%c0_11, %c0_12] : memref<16x64xf32, #tpu.memory_space<vmem>>, vector<16x64xf32>
      tpu.vector_store %arg7[%c0_11, %c0_12], %12 {strides = array<i32>} : memref<16x64xf32, #tpu.memory_space<vmem>>, vector<16x64xf32>,
    } else {
    }
    %c0 = arith.constant 0 : index
    %c0_1 = arith.constant 0 : index
    %3 = vector.load %arg7[%c0, %c0_1] : memref<16x64xf32, #tpu.memory_space<vmem>>, vector<16x64xf32>
    %c0_2 = arith.constant 0 : index
    %c0_3 = arith.constant 0 : index
    %4 = vector.load %arg3[%c0_2, %c0_3] : memref<16x32xbf16, #tpu.memory_space<vmem>>, vector<16x32xbf16>
    %c0_4 = arith.constant 0 : index
    %c0_5 = arith.constant 0 : index
    %5 = vector.load %arg4[%c0_4, %c0_5] : memref<32x64xbf16, #tpu.memory_space<vmem>>, vector<32x64xbf16>
    %cst = arith.constant dense<0.000000e+00> : vector<16x64xf32>
    %6 = tpu.matmul %4, %5, %cst {dimension_numbers = #tpu.dot_dimension_numbers<[1], [0], [0], [1], [0, 0, 1, 1], [], []>} : vector<16x32xbf16>, vector<32x64xbf16>, vector<16x64xf32> -> vector<16x64xf32>
    %7 = arith.addf %3, %6 : vector<16x64xf32>
    %c0_6 = arith.constant 0 : index
    %c0_7 = arith.constant 0 : index
    %8 = vector.load %arg7[%c0_6, %c0_7] : memref<16x64xf32, #tpu.memory_space<vmem>>, vector<16x64xf32>
    tpu.vector_store %arg7[%c0_6, %c0_7], %7 {strides = array<i32>} : memref<16x64xf32, #tpu.memory_space<vmem>>, vector<16x64xf32>,
    %c0_i32_8 = arith.constant 0 : i32
    %9 = arith.cmpi eq, %arg2, %c0_i32_8 : i32
    %10 = arith.extui %9 : i1 to i32
    %c0_i32_9 = arith.constant 0 : i32
    %11 = arith.cmpi ne, %10, %c0_i32_9 : i32
    scf.if %11 {
      %c0_10 = arith.constant 0 : index
      %c0_11 = arith.constant 0 : index
      %12 = vector.load %arg7[%c0_10, %c0_11] : memref<16x64xf32, #tpu.memory_space<vmem>>, vector<16x64xf32>
      %c0_12 = arith.constant 0 : index
      %c0_13 = arith.constant 0 : index
      %13 = vector.load %arg5[%c0_12, %c0_13] : memref<1x64xf32, #tpu.memory_space<vmem>>, vector<1x64xf32>
      %14 = vector.broadcast %13 : vector<1x64xf32> to vector<16x64xf32>
      %15 = arith.addf %12, %14 : vector<16x64xf32>
      %cst_14 = arith.constant 5.000000e-01 : f32
      %16 = vector.broadcast %cst_14 : f32 to vector<16x64xf32>
      %17 = arith.mulf %16, %15 : vector<16x64xf32>
      %cst_15 = arith.constant 4.471500e-02 : f32
      %18 = vector.broadcast %cst_15 : f32 to vector<16x64xf32>
      %19 = arith.mulf %18, %15 : vector<16x64xf32>
      %20 = arith.mulf %19, %15 : vector<16x64xf32>
      %21 = arith.mulf %20, %15 : vector<16x64xf32>
      %22 = arith.addf %15, %21 : vector<16x64xf32>
      %cst_16 = arith.constant 0.797884583 : f32
      %23 = vector.broadcast %cst_16 : f32 to vector<16x64xf32>
      %24 = arith.mulf %23, %22 : vector<16x64xf32>
      %25 = math.tanh %24 : vector<16x64xf32>
      %cst_17 = arith.constant 1.000000e+00 : f32
      %26 = vector.broadcast %cst_17 : f32 to vector<16x64xf32>
      %27 = arith.addf %26, %25 : vector<16x64xf32>
      %28 = arith.mulf %17, %27 : vector<16x64xf32>
      %29 = arith.truncf %28 : vector<16x64xf32> to vector<16x64xbf16>
      %c0_18 = arith.constant 0 : index
      %c0_19 = arith.constant 0 : index
      %30 = vector.load %arg6[%c0_18, %c0_19] : memref<16x64xbf16, #tpu.memory_space<vmem>>, vector<16x64xbf16>
      tpu.vector_store %arg6[%c0_18, %c0_19], %29 {strides = array<i32>} : memref<16x64xbf16, #tpu.memory_space<vmem>>, vector<16x64xbf16>,
    } else {
    }
    return
  }
  func.func @transform_0(%arg0: i32, %arg1: i32, %arg2: i32) -> (i32, i32) {
    %c0_i32 = arith.constant 0 : i32
    return %arg0, %arg2 : i32, i32
  }
  func.func @transform_1(%arg0: i32, %arg1: i32, %arg2: i32) -> (i32, i32) {
    %c0_i32 = arith.constant 0 : i32
    return %arg2, %arg1 : i32, i32
  }
  func.func @transform_2(%arg0: i32, %arg1: i32, %arg2: i32) -> (i32, i32) {
    %c0_i32 = arith.constant 0 : i32
    %c0_i32_0 = arith.constant 0 : i32
    return %c0_i32, %arg1 : i32, i32
  }
  func.func @transform_3(%arg0: i32, %arg1: i32, %arg2: i32) -> (i32, i32) {
    %c0_i32 = arith.constant 0 : i32
    return %arg0, %arg1 : i32, i32
  }
}

module attributes {stable_mosaic.version = 11 : i64} {
  func.func @_matmul_add_ln_kernel(%arg0: i32, %arg1: i32, %arg2: memref<16x64xbf16, #tpu.memory_space<vmem>>, %arg3: memref<64x32xbf16, #tpu.memory_space<vmem>>, %arg4: memref<1x32xf32, #tpu.memory_space<vmem>>, %arg5: memref<16x32xbf16, #tpu.memory_space<vmem>>, %arg6: memref<1x32xf32, #tpu.memory_space<vmem>>, %arg7: memref<1x32xf32, #tpu.memory_space<vmem>>, %arg8: memref<16x32xbf16, #tpu.memory_space<vmem>>, %arg9: memref<16x32xf32, #tpu.memory_space<vmem>>) attributes {dimension_semantics = [#tpu.dimension_semantics<parallel>, #tpu.dimension_semantics<arbitrary>], iteration_bounds = array<i64: 1, 1>, scalar_prefetch = 0 : i64, scratch_operands = 1 : i64, tpu.core_type = #tpu.core_type<tc>, window_params = [{transform_indices = @transform_0, window_bounds = array<i64: 16, 64>}, {transform_indices = @transform_1, window_bounds = array<i64: 64, 32>}, {pipeline_mode = #tpu.pipeline_mode<synchronous>, transform_indices = @transform_2, window_bounds = array<i64: 1, 32>}, {transform_indices = @transform_3, window_bounds = array<i64: 16, 32>}, {pipeline_mode = #tpu.pipeline_mode<synchronous>, transform_indices = @transform_4, window_bounds = array<i64: 1, 32>}, {pipeline_mode = #tpu.pipeline_mode<synchronous>, transform_indices = @transform_5, window_bounds = array<i64: 1, 32>}, {transform_indices = @transform_6, window_bounds = array<i64: 16, 32>}]} {
    %c0_i32 = arith.constant 0 : i32
    %0 = arith.cmpi eq, %arg1, %c0_i32 : i32
    %1 = arith.extui %0 : i1 to i32
    %c0_i32_0 = arith.constant 0 : i32
    %2 = arith.cmpi ne, %1, %c0_i32_0 : i32
    scf.if %2 {
      %cst_10 = arith.constant 0.000000e+00 : f32
      %12 = vector.broadcast %cst_10 : f32 to vector<16x32xf32>
      %c0_11 = arith.constant 0 : index
      %c0_12 = arith.constant 0 : index
      %13 = vector.load %arg9[%c0_11, %c0_12] : memref<16x32xf32, #tpu.memory_space<vmem>>, vector<16x32xf32>
      tpu.vector_store %arg9[%c0_11, %c0_12], %12 {strides = array<i32>} : memref<16x32xf32, #tpu.memory_space<vmem>>, vector<16x32xf32>,
    } else {
    }
    %c0 = arith.constant 0 : index
    %c0_1 = arith.constant 0 : index
    %3 = vector.load %arg9[%c0, %c0_1] : memref<16x32xf32, #tpu.memory_space<vmem>>, vector<16x32xf32>
    %c0_2 = arith.constant 0 : index
    %c0_3 = arith.constant 0 : index
    %4 = vector.load %arg2[%c0_2, %c0_3] : memref<16x64xbf16, #tpu.memory_space<vmem>>, vector<16x64xbf16>
    %c0_4 = arith.constant 0 : index
    %c0_5 = arith.constant 0 : index
    %5 = vector.load %arg3[%c0_4, %c0_5] : memref<64x32xbf16, #tpu.memory_space<vmem>>, vector<64x32xbf16>
    %cst = arith.constant dense<0.000000e+00> : vector<16x32xf32>
    %6 = tpu.matmul %4, %5, %cst {dimension_numbers = #tpu.dot_dimension_numbers<[1], [0], [0], [1], [0, 0, 1, 1], [], []>} : vector<16x64xbf16>, vector<64x32xbf16>, vector<16x32xf32> -> vector<16x32xf32>
    %7 = arith.addf %3, %6 : vector<16x32xf32>
    %c0_6 = arith.constant 0 : index
    %c0_7 = arith.constant 0 : index
    %8 = vector.load %arg9[%c0_6, %c0_7] : memref<16x32xf32, #tpu.memory_space<vmem>>, vector<16x32xf32>
    tpu.vector_store %arg9[%c0_6, %c0_7], %7 {strides = array<i32>} : memref<16x32xf32, #tpu.memory_space<vmem>>, vector<16x32xf32>,
    %c0_i32_8 = arith.constant 0 : i32
    %9 = arith.cmpi eq, %arg1, %c0_i32_8 : i32
    %10 = arith.extui %9 : i1 to i32
    %c0_i32_9 = arith.constant 0 : i32
    %11 = arith.cmpi ne, %10, %c0_i32_9 : i32
    scf.if %11 {
      %c0_10 = arith.constant 0 : index
      %c0_11 = arith.constant 0 : index
      %12 = vector.load %arg9[%c0_10, %c0_11] : memref<16x32xf32, #tpu.memory_space<vmem>>, vector<16x32xf32>
      %c0_12 = arith.constant 0 : index
      %c0_13 = arith.constant 0 : index
      %13 = vector.load %arg4[%c0_12, %c0_13] : memref<1x32xf32, #tpu.memory_space<vmem>>, vector<1x32xf32>
      %14 = vector.broadcast %13 : vector<1x32xf32> to vector<16x32xf32>
      %15 = arith.addf %12, %14 : vector<16x32xf32>
      %c0_14 = arith.constant 0 : index
      %c0_15 = arith.constant 0 : index
      %16 = vector.load %arg5[%c0_14, %c0_15] : memref<16x32xbf16, #tpu.memory_space<vmem>>, vector<16x32xbf16>
      %17 = arith.extf %16 : vector<16x32xbf16> to vector<16x32xf32>
      %18 = arith.addf %15, %17 : vector<16x32xf32>
      %cst_16 = arith.constant dense<0.000000e+00> : vector<16xf32>
      %19 = vector.multi_reduction <add>, %18, %cst_16 [1] : vector<16x32xf32> to vector<16xf32>
      %20 = vector.shape_cast %19 : vector<16xf32> to vector<16x1xf32>
      %cst_17 = arith.constant 3.200000e+01 : f32
      %21 = vector.broadcast %cst_17 : f32 to vector<16x1xf32>
      %22 = arith.divf %20, %21 : vector<16x1xf32>
      %23 = vector.broadcast %22 : vector<16x1xf32> to vector<16x32xf32>
      %24 = arith.subf %18, %23 : vector<16x32xf32>
      %25 = arith.mulf %24, %24 : vector<16x32xf32>
      %cst_18 = arith.constant dense<0.000000e+00> : vector<16xf32>
      %26 = vector.multi_reduction <add>, %25, %cst_18 [1] : vector<16x32xf32> to vector<16xf32>
      %27 = vector.shape_cast %26 : vector<16xf32> to vector<16x1xf32>
      %cst_19 = arith.constant 3.200000e+01 : f32
      %28 = vector.broadcast %cst_19 : f32 to vector<16x1xf32>
      %29 = arith.divf %27, %28 : vector<16x1xf32>
      %30 = vector.broadcast %22 : vector<16x1xf32> to vector<16x32xf32>
      %31 = arith.subf %18, %30 : vector<16x32xf32>
      %cst_20 = arith.constant 9.99999974E-6 : f32
      %32 = vector.broadcast %cst_20 : f32 to vector<16x1xf32>
      %33 = arith.addf %29, %32 : vector<16x1xf32>
      %34 = math.rsqrt %33 : vector<16x1xf32>
      %35 = vector.broadcast %34 : vector<16x1xf32> to vector<16x32xf32>
      %36 = arith.mulf %31, %35 : vector<16x32xf32>
      %c0_21 = arith.constant 0 : index
      %c0_22 = arith.constant 0 : index
      %37 = vector.load %arg6[%c0_21, %c0_22] : memref<1x32xf32, #tpu.memory_space<vmem>>, vector<1x32xf32>
      %38 = vector.broadcast %37 : vector<1x32xf32> to vector<16x32xf32>
      %39 = arith.mulf %36, %38 : vector<16x32xf32>
      %c0_23 = arith.constant 0 : index
      %c0_24 = arith.constant 0 : index
      %40 = vector.load %arg7[%c0_23, %c0_24] : memref<1x32xf32, #tpu.memory_space<vmem>>, vector<1x32xf32>
      %41 = vector.broadcast %40 : vector<1x32xf32> to vector<16x32xf32>
      %42 = arith.addf %39, %41 : vector<16x32xf32>
      %43 = arith.truncf %42 : vector<16x32xf32> to vector<16x32xbf16>
      %c0_25 = arith.constant 0 : index
      %c0_26 = arith.constant 0 : index
      %44 = vector.load %arg8[%c0_25, %c0_26] : memref<16x32xbf16, #tpu.memory_space<vmem>>, vector<16x32xbf16>
      tpu.vector_store %arg8[%c0_25, %c0_26], %43 {strides = array<i32>} : memref<16x32xbf16, #tpu.memory_space<vmem>>, vector<16x32xbf16>,
    } else {
    }
    return
  }
  func.func @transform_0(%arg0: i32, %arg1: i32) -> (i32, i32) {
    %c0_i32 = arith.constant 0 : i32
    return %arg0, %arg1 : i32, i32
  }
  func.func @transform_1(%arg0: i32, %arg1: i32) -> (i32, i32) {
    %c0_i32 = arith.constant 0 : i32
    %c0_i32_0 = arith.constant 0 : i32
    return %arg1, %c0_i32 : i32, i32
  }
  func.func @transform_2(%arg0: i32, %arg1: i32) -> (i32, i32) {
    %c0_i32 = arith.constant 0 : i32
    %c0_i32_0 = arith.constant 0 : i32
    %c0_i32_1 = arith.constant 0 : i32
    return %c0_i32, %c0_i32_0 : i32, i32
  }
  func.func @transform_3(%arg0: i32, %arg1: i32) -> (i32, i32) {
    %c0_i32 = arith.constant 0 : i32
    %c0_i32_0 = arith.constant 0 : i32
    return %arg0, %c0_i32 : i32, i32
  }
  func.func @transform_4(%arg0: i32, %arg1: i32) -> (i32, i32) {
    %c0_i32 = arith.constant 0 : i32
    %c0_i32_0 = arith.constant 0 : i32
    %c0_i32_1 = arith.constant 0 : i32
    return %c0_i32, %c0_i32_0 : i32, i32
  }
  func.func @transform_5(%arg0: i32, %arg1: i32) -> (i32, i32) {
    %c0_i32 = arith.constant 0 : i32
    %c0_i32_0 = arith.constant 0 : i32
    %c0_i32_1 = arith.constant 0 : i32
    return %c0_i32, %c0_i32_0 : i32, i32
  }
  func.func @transform_6(%arg0: i32, %arg1: i32) -> (i32, i32) {
    %c0_i32 = arith.constant 0 : i32
    %c0_i32_0 = arith.constant 0 : i32
    return %arg0, %c0_i32 : i32, i32
  }
}

module attributes {stable_mosaic.version = 11 : i64} {
  func.func @_matmul_kernel(%arg0: i32, %arg1: i32, %arg2: i32, %arg3: memref<16x32xbf16, #tpu.memory_space<vmem>>, %arg4: memref<32x128xbf16, #tpu.memory_space<vmem>>, %arg5: memref<1x128xf32, #tpu.memory_space<vmem>>, %arg6: memref<16x128xf32, #tpu.memory_space<vmem>>, %arg7: memref<16x128xf32, #tpu.memory_space<vmem>>) attributes {dimension_semantics = [#tpu.dimension_semantics<parallel>, #tpu.dimension_semantics<parallel>, #tpu.dimension_semantics<arbitrary>], iteration_bounds = array<i64: 1, 1, 1>, scalar_prefetch = 0 : i64, scratch_operands = 1 : i64, tpu.core_type = #tpu.core_type<tc>, window_params = [{transform_indices = @transform_0, window_bounds = array<i64: 16, 32>}, {transform_indices = @transform_1, window_bounds = array<i64: 32, 128>}, {transform_indices = @transform_2, window_bounds = array<i64: 1, 128>}, {transform_indices = @transform_3, window_bounds = array<i64: 16, 128>}]} {
    %c0_i32 = arith.constant 0 : i32
    %0 = arith.cmpi eq, %arg2, %c0_i32 : i32
    %1 = arith.extui %0 : i1 to i32
    %c0_i32_0 = arith.constant 0 : i32
    %2 = arith.cmpi ne, %1, %c0_i32_0 : i32
    scf.if %2 {
      %cst_10 = arith.constant 0.000000e+00 : f32
      %12 = vector.broadcast %cst_10 : f32 to vector<16x128xf32>
      %c0_11 = arith.constant 0 : index
      %c0_12 = arith.constant 0 : index
      %13 = vector.load %arg7[%c0_11, %c0_12] : memref<16x128xf32, #tpu.memory_space<vmem>>, vector<16x128xf32>
      tpu.vector_store %arg7[%c0_11, %c0_12], %12 {strides = array<i32>} : memref<16x128xf32, #tpu.memory_space<vmem>>, vector<16x128xf32>,
    } else {
    }
    %c0 = arith.constant 0 : index
    %c0_1 = arith.constant 0 : index
    %3 = vector.load %arg7[%c0, %c0_1] : memref<16x128xf32, #tpu.memory_space<vmem>>, vector<16x128xf32>
    %c0_2 = arith.constant 0 : index
    %c0_3 = arith.constant 0 : index
    %4 = vector.load %arg3[%c0_2, %c0_3] : memref<16x32xbf16, #tpu.memory_space<vmem>>, vector<16x32xbf16>
    %c0_4 = arith.constant 0 : index
    %c0_5 = arith.constant 0 : index
    %5 = vector.load %arg4[%c0_4, %c0_5] : memref<32x128xbf16, #tpu.memory_space<vmem>>, vector<32x128xbf16>
    %cst = arith.constant dense<0.000000e+00> : vector<16x128xf32>
    %6 = tpu.matmul %4, %5, %cst {dimension_numbers = #tpu.dot_dimension_numbers<[1], [0], [0], [1], [0, 0, 1, 1], [], []>} : vector<16x32xbf16>, vector<32x128xbf16>, vector<16x128xf32> -> vector<16x128xf32>
    %7 = arith.addf %3, %6 : vector<16x128xf32>
    %c0_6 = arith.constant 0 : index
    %c0_7 = arith.constant 0 : index
    %8 = vector.load %arg7[%c0_6, %c0_7] : memref<16x128xf32, #tpu.memory_space<vmem>>, vector<16x128xf32>
    tpu.vector_store %arg7[%c0_6, %c0_7], %7 {strides = array<i32>} : memref<16x128xf32, #tpu.memory_space<vmem>>, vector<16x128xf32>,
    %c0_i32_8 = arith.constant 0 : i32
    %9 = arith.cmpi eq, %arg2, %c0_i32_8 : i32
    %10 = arith.extui %9 : i1 to i32
    %c0_i32_9 = arith.constant 0 : i32
    %11 = arith.cmpi ne, %10, %c0_i32_9 : i32
    scf.if %11 {
      %c0_10 = arith.constant 0 : index
      %c0_11 = arith.constant 0 : index
      %12 = vector.load %arg7[%c0_10, %c0_11] : memref<16x128xf32, #tpu.memory_space<vmem>>, vector<16x128xf32>
      %c0_12 = arith.constant 0 : index
      %c0_13 = arith.constant 0 : index
      %13 = vector.load %arg5[%c0_12, %c0_13] : memref<1x128xf32, #tpu.memory_space<vmem>>, vector<1x128xf32>
      %14 = vector.broadcast %13 : vector<1x128xf32> to vector<16x128xf32>
      %15 = arith.addf %12, %14 : vector<16x128xf32>
      %c0_14 = arith.constant 0 : index
      %c0_15 = arith.constant 0 : index
      %16 = vector.load %arg6[%c0_14, %c0_15] : memref<16x128xf32, #tpu.memory_space<vmem>>, vector<16x128xf32>
      tpu.vector_store %arg6[%c0_14, %c0_15], %15 {strides = array<i32>} : memref<16x128xf32, #tpu.memory_space<vmem>>, vector<16x128xf32>,
    } else {
    }
    return
  }
  func.func @transform_0(%arg0: i32, %arg1: i32, %arg2: i32) -> (i32, i32) {
    %c0_i32 = arith.constant 0 : i32
    return %arg0, %arg2 : i32, i32
  }
  func.func @transform_1(%arg0: i32, %arg1: i32, %arg2: i32) -> (i32, i32) {
    %c0_i32 = arith.constant 0 : i32
    return %arg2, %arg1 : i32, i32
  }
  func.func @transform_2(%arg0: i32, %arg1: i32, %arg2: i32) -> (i32, i32) {
    %c0_i32 = arith.constant 0 : i32
    %c0_i32_0 = arith.constant 0 : i32
    return %c0_i32, %arg1 : i32, i32
  }
  func.func @transform_3(%arg0: i32, %arg1: i32, %arg2: i32) -> (i32, i32) {
    %c0_i32 = arith.constant 0 : i32
    return %arg0, %arg1 : i32, i32
  }
}

</mosaic_0001>

<llo_original>
// kernel: model_forward.16
$region0: #{model_forward.16}
  #allocation0 [shape = 'u32[]', space=smem, size = 0x4, offset = 0x4, fixed_abs, tag = 'smem constant byte address 0x4 - core index']
  #allocation1 [shape = 'u32[144,128]{1,0:T(1,128)}', space=vmem, size = 0x12000, scoped, tag = 'internal scratch']
  %s0 = inlined_call_operand.vmem [shape: bf16[16,32], index: 0, kind: input, shape index: {}]
  %s1 = inlined_call_operand.vmem [shape: bf16[16,32], index: 1, kind: input, shape index: {}]
  %s2 = inlined_call_operand.vmem [shape: bf16[1,32], index: 2, kind: input, shape index: {}]
  %s3 = inlined_call_operand.vmem [shape: f32[1,32], index: 3, kind: input, shape index: {}]
  %s4 = inlined_call_operand.vmem [shape: f32[1,32], index: 4, kind: input, shape index: {}]
  %s5 = inlined_call_operand.vmem [shape: bf16[16,32], index: 5, kind: output, shape index: {}]
  %s6 = sld [smem:[#allocation0]]
  $region30: #{model_forward.16} parent=0
    _
  %s8 = ssub.s32 1, %s6
  %s9 = scalar_select 0, %s8, %s6
  // Predicated region
  $region2: #{model_forward.16} parent=0 // pred_check
    _
  $region3: #{model_forward.16} parent=0 // pred_check_branch
    %11 = sbr.rel (0) target = $region5
  $region4: #{model_forward.16} parent=0 // pred_region
    _
  $region5: #{model_forward.16} parent=0 // pred_fallthru
    _
  // Predicated region
  $region6: #{model_forward.16} parent=0 // pred_check
    _
  $region7: #{model_forward.16} parent=0 // pred_check_branch
    %13 = sbr.rel (0) target = $region9
  $region8: #{model_forward.16} parent=0 // pred_region
    _
  $region9: #{model_forward.16} parent=0 // pred_fallthru
    _
  // Predicated region
  $region10: #{model_forward.16} parent=0 // pred_check
    _
  $region11: #{model_forward.16} parent=0 // pred_check_branch
    %15 = sbr.rel (0) target = $region13
  $region12: #{model_forward.16} parent=0 // pred_region
    _
  $region13: #{model_forward.16} parent=0 // pred_fallthru
    _
  // Predicated region
  $region14: #{model_forward.16} parent=0 // pred_check
    _
  $region15: #{model_forward.16} parent=0 // pred_check_branch
    %17 = sbr.rel (0) target = $region17
  $region16: #{model_forward.16} parent=0 // pred_region
    _
  $region17: #{model_forward.16} parent=0 // pred_fallthru
    _
  // Predicated region
  $region18: #{model_forward.16} parent=0 // pred_check
    _
  $region19: #{model_forward.16} parent=0 // pred_check_branch
    %19 = sbr.rel (0) target = $region21
  $region20: #{model_forward.16} parent=0 // pred_region
    _
  $region21: #{model_forward.16} parent=0 // pred_fallthru
    _
  %v20 = vld [vmem:[%s0] sm:$0xf]
  %v21 = vld [vmem:[%s0 + $0x4] sm:$0xf]
  %v22 = vunpack.c.l.bf16 %v20
  %v23 = vunpack.c.l.bf16 %v21
  %v24 = vld [vmem:[%s1] sm:$0xf]
  %v25 = vld [vmem:[%s1 + $0x4] sm:$0xf]
  %v26 = vunpack.c.l.bf16 %v24
  %v27 = vunpack.c.l.bf16 %v25
  %v28 = vadd.f32 %v22, %v26
  %v29 = vadd.f32 %v23, %v27
  %v30 = vld [vmem:[%s2] sm:$0x1]
  %v31 = vunpack.c.l.bf16 %v30
  %v32 = vlaneseq
  %v33 = vshrl.u32 %v32, 7
  %v34 = vsub.s32 0, %v33
  %v35 = vrot.slane %v31, %v34
  %v36 = vadd.f32 %v28, %v35
  %v37 = vadd.f32 %v29, %v35
  %vm38 = vcmask 261120
  %v39 = vsel %vm38, %v36, 0.0
  %40 = vadd.xlane.f32.xlu0 %v39
  %v41 = vpop.xlane.xlu0 %40
  %v42 = vsel %vm38, %v37, 0.0
  %43 = vadd.xlane.f32.xlu0 %v42
  %v44 = vpop.xlane.xlu0 %43
  %v45 = vrcp.pop 32.0
  %v46 = vmul.f32 %v41, %v45
  %v47 = vmul.f32 %v44, %v45
  %v48 = vsub.f32 %v36, %v46
  %v49 = vsub.f32 %v37, %v47
  %v50 = vmul.f32 %v48, %v48
  %v51 = vmul.f32 %v49, %v49
  %v52 = vsel %vm38, %v50, 0.0
  %53 = vadd.xlane.f32.xlu0 %v52
  %v54 = vpop.xlane.xlu0 %53
  %v55 = vsel %vm38, %v51, 0.0
  %56 = vadd.xlane.f32.xlu0 %v55
  %v57 = vpop.xlane.xlu0 %56
  %v58 = vmul.f32 %v54, %v45
  %v59 = vmul.f32 %v57, %v45
  %v60 = vadd.f32 %v58, 1e-05
  %v61 = vadd.f32 %v59, 1e-05
  %v62 = vrsqrt.pop %v60
  %v63 = vrsqrt.pop %v61
  %v64 = vmul.f32 %v48, %v62
  %v65 = vmul.f32 %v49, %v63
  %v66 = vld [vmem:[%s3] sm:$0x1]
  %v68 = vlaneseq
  %v69 = vshrl.u32 %v68, 7
  %v70 = vsub.s32 0, %v69
  %v71 = vrot.slane %v66, %v70
  %v73 = vmul.f32 %v64, %v71
  %v74 = vmul.f32 %v65, %v71
  %v75 = vld [vmem:[%s4] sm:$0x1]
  %v77 = vlaneseq
  %v78 = vshrl.u32 %v77, 7
  %v79 = vsub.s32 0, %v78
  %v80 = vrot.slane %v75, %v79
  %v82 = vadd.f32 %v73, %v80
  %v83 = vadd.f32 %v74, %v80
  %v84 = vpack.c.bf16 %v83, %v82
  %v86 = vunpack.c.l.b16 %v84
  %v87 = vunpack.c.h.b16 %v84
  %v88 = vpack.c.b16 %v86, %v86
  %v89 = vpack.c.b16 %v87, %v87
  %vm92 = vcmask 257024
  %93 = vst.msk [vmem:[%s5] sm:$0xf] %vm92, %v88
  %94 = vst.msk [vmem:[%s5 + $0x4] sm:$0xf] %vm92, %v89
  // Predicated region
  $region22: #{model_forward.16} parent=0 // pred_check
    _
  $region23: #{model_forward.16} parent=0 // pred_check_branch
    %96 = sbr.rel (0) target = $region25
  $region24: #{model_forward.16} parent=0 // pred_region
    _
  $region25: #{model_forward.16} parent=0 // pred_fallthru
    _
  // Predicated region
  $region26: #{model_forward.16} parent=0 // pred_check
    _
  $region27: #{model_forward.16} parent=0 // pred_check_branch
    %98 = sbr.rel (0) target = $region29
  $region28: #{model_forward.16} parent=0 // pred_region
    _
  $region29: #{model_forward.16} parent=0 // pred_fallthru
    _

// kernel: model_forward.17
$region0: #{model_forward.17}
  #allocation0 [shape = 'u32[]', space=smem, size = 0x4, offset = 0x4, fixed_abs, tag = 'smem constant byte address 0x4 - core index']
  #allocation1 [shape = 'u32[144,128]{1,0:T(1,128)}', space=vmem, size = 0x12000, scoped, tag = 'internal scratch']
  #allocation2 [shape = 'f32[16,32]{1,0:T(8,128)}', space=vmem, size = 0x2000, scoped, tag = 'scratch operand']
  %s0 = inlined_call_operand.vmem [shape: bf16[16,32], index: 0, kind: input, shape index: {}]
  %s1 = inlined_call_operand.vmem [shape: bf16[32,32], index: 1, kind: input, shape index: {}]
  %s2 = inlined_call_operand.vmem [shape: f32[1,32], index: 2, kind: input, shape index: {}]
  %s3 = inlined_call_operand.vmem [shape: bf16[16,32], index: 3, kind: output, shape index: {}]
  %s4 = sld [smem:[#allocation0]]
  $region30: #{model_forward.17} parent=0
    _
  %s6 = ssub.s32 1, %s4
  %s7 = scalar_select 0, %s6, %s4
  // Predicated region
  $region2: #{model_forward.17} parent=0 // pred_check
    _
  $region3: #{model_forward.17} parent=0 // pred_check_branch
    %9 = sbr.rel (0) target = $region5
  $region4: #{model_forward.17} parent=0 // pred_region
    _
  $region5: #{model_forward.17} parent=0 // pred_fallthru
    _
  // Predicated region
  $region6: #{model_forward.17} parent=0 // pred_check
    _
  $region7: #{model_forward.17} parent=0 // pred_check_branch
    %11 = sbr.rel (0) target = $region9
  $region8: #{model_forward.17} parent=0 // pred_region
    _
  $region9: #{model_forward.17} parent=0 // pred_fallthru
    _
  // Predicated region
  $region10: #{model_forward.17} parent=0 // pred_check
    _
  $region11: #{model_forward.17} parent=0 // pred_check_branch
    %13 = sbr.rel (0) target = $region13
  $region12: #{model_forward.17} parent=0 // pred_region
    _
  $region13: #{model_forward.17} parent=0 // pred_fallthru
    _
  %p15 = scmp.eq.s32.totalorder 0, 0
  // Predicated region
  $region14: #{model_forward.17} parent=0 // pred_check
    %p16 = pneg %p15
  $region15: #{model_forward.17} parent=0 // pred_check_branch
    %18 = sbr.rel (%p16) target = $region17
  $region16: #{model_forward.17} parent=0 // pred_region
    %vm19 = vcmask 261120
    %20 = vst.msk [vmem:[#allocation2] sm:$0xff] %vm19, 0.0
    %21 = vst.msk [vmem:[#allocation2 + $0x8] sm:$0xff] %vm19, 0.0
  $region17: #{model_forward.17} parent=0 // pred_fallthru
    _
  %v22 = vld [vmem:[#allocation2] sm:$0xff]
  %v23 = vld [vmem:[#allocation2 + $0x8] sm:$0xff]
  %v24 = vld [vmem:[%s0] sm:$0xf]
  %v25 = vld [vmem:[%s0 + $0x4] sm:$0xf]
  %v26 = vld [vmem:[%s1] sm:$0xf]
  %v27 = vld [vmem:[%s1 + $0x4] sm:$0xf]
  %v28 = vld [vmem:[%s1 + $0x8] sm:$0xf]
  %v29 = vld [vmem:[%s1 + $0xc] sm:$0xf]
  %v32 = vunpack.c.l.b16 %v24
  %v33 = vunpack.c.l.b16 %v25
  %v34 = vpack.c.b16 %v33, %v32
  %v39 = vunpack.c.l.b16 %v26
  %v40 = vunpack.c.l.b16 %v27
  %v41 = vunpack.c.l.b16 %v28
  %v42 = vunpack.c.l.b16 %v29
  %v43 = vpack.c.b16 %v40, %v39
  %v44 = vpack.c.b16 %v42, %v41
  %vm47 = vcmask 261120
  %v49 = vsel %vm47, %v34, 0
  %51 = vmatprep.subr.bf16.mxu0 0
  %52 = vmatpush1.bf16.msra.mxu0 %v43
  %53 = vmatprep.subr.bf16.mxu0 0
  %54 = vmatpush1.bf16.msra.mxu0 %v44
  %55 = vmatprep.subr.bf16.mxu0 0
  %56 = vmatpush1.bf16.msra.mxu0 0
  %57 = vmatprep.subr.bf16.mxu0 0
  %58 = vmatpush1.bf16.msra.mxu0 0
  %59 = vmatprep.subr.bf16.mxu0 0
  %60 = vmatpush1.bf16.msra.mxu0 0
  %61 = vmatprep.subr.bf16.mxu0 0
  %62 = vmatpush1.bf16.msra.mxu0 0
  %63 = vmatprep.subr.bf16.mxu0 0
  %64 = vmatpush1.bf16.msra.mxu0 0
  %65 = vmatprep.subr.bf16.mxu0 0
  %66 = vmatpush1.bf16.msra.mxu0 0
  %67 = vmatprep.subr.bf16.mxu0 0
  %68 = vmatpush1.bf16.msra.mxu0 0
  %69 = vmatprep.subr.bf16.mxu0 0
  %70 = vmatpush1.bf16.msra.mxu0 0
  %71 = vmatprep.subr.bf16.mxu0 0
  %72 = vmatpush1.bf16.msra.mxu0 0
  %73 = vmatprep.subr.bf16.mxu0 0
  %74 = vmatpush1.bf16.msra.mxu0 0
  %75 = vmatprep.subr.bf16.mxu0 0
  %76 = vmatpush1.bf16.msra.mxu0 0
  %77 = vmatprep.subr.bf16.mxu0 0
  %78 = vmatpush1.bf16.msra.mxu0 0
  %79 = vmatprep.subr.bf16.mxu0 0
  %80 = vmatpush1.bf16.msra.mxu0 0
  %81 = vmatprep.subr.bf16.mxu0 0
  %82 = vmatpush1.bf16.msra.mxu0 0
  %83 = vmatprep.mubr.bf16.mxu0 0
  %84 = vmatmul.mubr.bf16.gmra.mrb[0].mxu0 %v49
  %v85 = vpop.f32.mrb[0].mxu0
  %v86 = vadd.f32 0.0, %v85
  %v87 = vpop.f32.mrb[0].mxu0
  %v88 = vpop.f32.mrb[0].mxu0
  %v89 = vadd.f32 0.0, %v88
  %v90 = vpop.f32.mrb[0].mxu0
  %91 = vdwg.mxu0
  %v92 = vadd.f32 %v22, %v86
  %v93 = vadd.f32 %v23, %v89
  %94 = vst.msk [vmem:[#allocation2] sm:$0xff] %vm47, %v92
  %95 = vst.msk [vmem:[#allocation2 + $0x8] sm:$0xff] %vm47, %v93
  // Predicated region
  $region18: #{model_forward.17} parent=0 // pred_check
    %p96 = pneg %p15
  $region19: #{model_forward.17} parent=0 // pred_check_branch
    %98 = sbr.rel (%p96) target = $region21
  $region20: #{model_forward.17} parent=0 // pred_region
    %v99 = vld [vmem:[#allocation2] sm:$0xff]
    %v100 = vld [vmem:[#allocation2 + $0x8] sm:$0xff]
    %v101 = vld [vmem:[%s2] sm:$0x1]
    %v103 = vlaneseq
    %v104 = vshrl.u32 %v103, 7
    %v105 = vsub.s32 0, %v104
    %v106 = vrot.slane %v101, %v105
    %v108 = vadd.f32 %v99, %v106
    %v109 = vadd.f32 %v100, %v106
    %v110 = vpack.c.bf16 %v109, %v108
    %v112 = vunpack.c.l.b16 %v110
    %v113 = vunpack.c.h.b16 %v110
    %v114 = vpack.c.b16 %v112, %v112
    %v115 = vpack.c.b16 %v113, %v113
    %vm118 = vcmask 257024
    %119 = vst.msk [vmem:[%s3] sm:$0xf] %vm118, %v114
    %120 = vst.msk [vmem:[%s3 + $0x4] sm:$0xf] %vm118, %v115
  $region21: #{model_forward.17} parent=0 // pred_fallthru
    _
  // Predicated region
  $region22: #{model_forward.17} parent=0 // pred_check
    _
  $region23: #{model_forward.17} parent=0 // pred_check_branch
    %122 = sbr.rel (0) target = $region25
  $region24: #{model_forward.17} parent=0 // pred_region
    _
  $region25: #{model_forward.17} parent=0 // pred_fallthru
    _
  // Predicated region
  $region26: #{model_forward.17} parent=0 // pred_check
    _
  $region27: #{model_forward.17} parent=0 // pred_check_branch
    %124 = sbr.rel (0) target = $region29
  $region28: #{model_forward.17} parent=0 // pred_region
    _
  $region29: #{model_forward.17} parent=0 // pred_fallthru
    _

// kernel: model_forward.21
$region0: #{model_forward.21}
  #allocation0 [shape = 'u32[]', space=smem, size = 0x4, offset = 0x4, fixed_abs, tag = 'smem constant byte address 0x4 - core index']
  #allocation1 [shape = 'u32[144,128]{1,0:T(1,128)}', space=vmem, size = 0x12000, scoped, tag = 'internal scratch']
  #allocation2 [shape = 'f32[16,32]{1,0:T(8,128)}', space=vmem, size = 0x2000, scoped, tag = 'scratch operand']
  %s0 = inlined_call_operand.vmem [shape: bf16[16,32], index: 0, kind: input, shape index: {}]
  %s1 = inlined_call_operand.vmem [shape: bf16[32,32], index: 1, kind: input, shape index: {}]
  %s2 = inlined_call_operand.vmem [shape: f32[1,32], index: 2, kind: input, shape index: {}]
  %s3 = inlined_call_operand.vmem [shape: bf16[16,32], index: 3, kind: input, shape index: {}]
  %s4 = inlined_call_operand.vmem [shape: f32[1,32], index: 4, kind: input, shape index: {}]
  %s5 = inlined_call_operand.vmem [shape: f32[1,32], index: 5, kind: input, shape index: {}]
  %s6 = inlined_call_operand.vmem [shape: bf16[16,32], index: 6, kind: output, shape index: {}]
  %s7 = sld [smem:[#allocation0]]
  $region42: #{model_forward.21} parent=0
    _
  %s9 = ssub.s32 1, %s7
  %s10 = scalar_select 0, %s9, %s7
  // Predicated region
  $region2: #{model_forward.21} parent=0 // pred_check
    _
  $region3: #{model_forward.21} parent=0 // pred_check_branch
    %12 = sbr.rel (0) target = $region5
  $region4: #{model_forward.21} parent=0 // pred_region
    _
  $region5: #{model_forward.21} parent=0 // pred_fallthru
    _
  // Predicated region
  $region6: #{model_forward.21} parent=0 // pred_check
    _
  $region7: #{model_forward.21} parent=0 // pred_check_branch
    %14 = sbr.rel (0) target = $region9
  $region8: #{model_forward.21} parent=0 // pred_region
    _
  $region9: #{model_forward.21} parent=0 // pred_fallthru
    _
  // Predicated region
  $region10: #{model_forward.21} parent=0 // pred_check
    _
  $region11: #{model_forward.21} parent=0 // pred_check_branch
    %16 = sbr.rel (0) target = $region13
  $region12: #{model_forward.21} parent=0 // pred_region
    _
  $region13: #{model_forward.21} parent=0 // pred_fallthru
    _
  // Predicated region
  $region14: #{model_forward.21} parent=0 // pred_check
    _
  $region15: #{model_forward.21} parent=0 // pred_check_branch
    %18 = sbr.rel (0) target = $region17
  $region16: #{model_forward.21} parent=0 // pred_region
    _
  $region17: #{model_forward.21} parent=0 // pred_fallthru
    _
  // Predicated region
  $region18: #{model_forward.21} parent=0 // pred_check
    _
  $region19: #{model_forward.21} parent=0 // pred_check_branch
    %20 = sbr.rel (0) target = $region21
  $region20: #{model_forward.21} parent=0 // pred_region
    _
  $region21: #{model_forward.21} parent=0 // pred_fallthru
    _
  // Predicated region
  $region22: #{model_forward.21} parent=0 // pred_check
    _
  $region23: #{model_forward.21} parent=0 // pred_check_branch
    %22 = sbr.rel (0) target = $region25
  $region24: #{model_forward.21} parent=0 // pred_region
    _
  $region25: #{model_forward.21} parent=0 // pred_fallthru
    _
  %p24 = scmp.eq.s32.totalorder 0, 0
  // Predicated region
  $region26: #{model_forward.21} parent=0 // pred_check
    %p25 = pneg %p24
  $region27: #{model_forward.21} parent=0 // pred_check_branch
    %27 = sbr.rel (%p25) target = $region29
  $region28: #{model_forward.21} parent=0 // pred_region
    %vm28 = vcmask 261120
    %29 = vst.msk [vmem:[#allocation2] sm:$0xff] %vm28, 0.0
    %30 = vst.msk [vmem:[#allocation2 + $0x8] sm:$0xff] %vm28, 0.0
  $region29: #{model_forward.21} parent=0 // pred_fallthru
    _
  %v31 = vld [vmem:[#allocation2] sm:$0xff]
  %v32 = vld [vmem:[#allocation2 + $0x8] sm:$0xff]
  %v33 = vld [vmem:[%s0] sm:$0xf]
  %v34 = vld [vmem:[%s0 + $0x4] sm:$0xf]
  %v35 = vld [vmem:[%s1] sm:$0xf]
  %v36 = vld [vmem:[%s1 + $0x4] sm:$0xf]
  %v37 = vld [vmem:[%s1 + $0x8] sm:$0xf]
  %v38 = vld [vmem:[%s1 + $0xc] sm:$0xf]
  %v41 = vunpack.c.l.b16 %v33
  %v42 = vunpack.c.l.b16 %v34
  %v43 = vpack.c.b16 %v42, %v41
  %v48 = vunpack.c.l.b16 %v35
  %v49 = vunpack.c.l.b16 %v36
  %v50 = vunpack.c.l.b16 %v37
  %v51 = vunpack.c.l.b16 %v38
  %v52 = vpack.c.b16 %v49, %v48
  %v53 = vpack.c.b16 %v51, %v50
  %vm56 = vcmask 261120
  %v58 = vsel %vm56, %v43, 0
  %60 = vmatprep.subr.bf16.mxu0 0
  %61 = vmatpush1.bf16.msra.mxu0 %v52
  %62 = vmatprep.subr.bf16.mxu0 0
  %63 = vmatpush1.bf16.msra.mxu0 %v53
  %64 = vmatprep.subr.bf16.mxu0 0
  %65 = vmatpush1.bf16.msra.mxu0 0
  %66 = vmatprep.subr.bf16.mxu0 0
  %67 = vmatpush1.bf16.msra.mxu0 0
  %68 = vmatprep.subr.bf16.mxu0 0
  %69 = vmatpush1.bf16.msra.mxu0 0
  %70 = vmatprep.subr.bf16.mxu0 0
  %71 = vmatpush1.bf16.msra.mxu0 0
  %72 = vmatprep.subr.bf16.mxu0 0
  %73 = vmatpush1.bf16.msra.mxu0 0
  %74 = vmatprep.subr.bf16.mxu0 0
  %75 = vmatpush1.bf16.msra.mxu0 0
  %76 = vmatprep.subr.bf16.mxu0 0
  %77 = vmatpush1.bf16.msra.mxu0 0
  %78 = vmatprep.subr.bf16.mxu0 0
  %79 = vmatpush1.bf16.msra.mxu0 0
  %80 = vmatprep.subr.bf16.mxu0 0
  %81 = vmatpush1.bf16.msra.mxu0 0
  %82 = vmatprep.subr.bf16.mxu0 0
  %83 = vmatpush1.bf16.msra.mxu0 0
  %84 = vmatprep.subr.bf16.mxu0 0
  %85 = vmatpush1.bf16.msra.mxu0 0
  %86 = vmatprep.subr.bf16.mxu0 0
  %87 = vmatpush1.bf16.msra.mxu0 0
  %88 = vmatprep.subr.bf16.mxu0 0
  %89 = vmatpush1.bf16.msra.mxu0 0
  %90 = vmatprep.subr.bf16.mxu0 0
  %91 = vmatpush1.bf16.msra.mxu0 0
  %92 = vmatprep.mubr.bf16.mxu0 0
  %93 = vmatmul.mubr.bf16.gmra.mrb[0].mxu0 %v58
  %v94 = vpop.f32.mrb[0].mxu0
  %v95 = vadd.f32 0.0, %v94
  %v96 = vpop.f32.mrb[0].mxu0
  %v97 = vpop.f32.mrb[0].mxu0
  %v98 = vadd.f32 0.0, %v97
  %v99 = vpop.f32.mrb[0].mxu0
  %100 = vdwg.mxu0
  %v101 = vadd.f32 %v31, %v95
  %v102 = vadd.f32 %v32, %v98
  %103 = vst.msk [vmem:[#allocation2] sm:$0xff] %vm56, %v101
  %104 = vst.msk [vmem:[#allocation2 + $0x8] sm:$0xff] %vm56, %v102
  // Predicated region
  $region30: #{model_forward.21} parent=0 // pred_check
    %p105 = pneg %p24
  $region31: #{model_forward.21} parent=0 // pred_check_branch
    %107 = sbr.rel (%p105) target = $region33
  $region32: #{model_forward.21} parent=0 // pred_region
    %v108 = vld [vmem:[#allocation2] sm:$0xff]
    %v109 = vld [vmem:[#allocation2 + $0x8] sm:$0xff]
    %v110 = vld [vmem:[%s2] sm:$0x1]
    %v112 = vlaneseq
    %v113 = vshrl.u32 %v112, 7
    %v114 = vsub.s32 0, %v113
    %v115 = vrot.slane %v110, %v114
    %v117 = vadd.f32 %v108, %v115
    %v118 = vadd.f32 %v109, %v115
    %v119 = vld [vmem:[%s3] sm:$0xf]
    %v120 = vld [vmem:[%s3 + $0x4] sm:$0xf]
    %v121 = vunpack.c.l.bf16 %v119
    %v122 = vunpack.c.l.bf16 %v120
    %v123 = vadd.f32 %v117, %v121
    %v124 = vadd.f32 %v118, %v122
    %v125 = vsel %vm56, %v123, 0.0
    %126 = vadd.xlane.f32.xlu0 %v125
    %v127 = vpop.xlane.xlu0 %126
    %v128 = vsel %vm56, %v124, 0.0
    %129 = vadd.xlane.f32.xlu0 %v128
    %v130 = vpop.xlane.xlu0 %129
    %v131 = vrcp.pop 32.0
    %v132 = vmul.f32 %v127, %v131
    %v133 = vmul.f32 %v130, %v131
    %v134 = vsub.f32 %v123, %v132
    %v135 = vsub.f32 %v124, %v133
    %v136 = vmul.f32 %v134, %v134
    %v137 = vmul.f32 %v135, %v135
    %v138 = vsel %vm56, %v136, 0.0
    %139 = vadd.xlane.f32.xlu0 %v138
    %v140 = vpop.xlane.xlu0 %139
    %v141 = vsel %vm56, %v137, 0.0
    %142 = vadd.xlane.f32.xlu0 %v141
    %v143 = vpop.xlane.xlu0 %142
    %v144 = vmul.f32 %v140, %v131
    %v145 = vmul.f32 %v143, %v131
    %v146 = vadd.f32 %v144, 1e-05
    %v147 = vadd.f32 %v145, 1e-05
    %v148 = vrsqrt.pop %v146
    %v149 = vrsqrt.pop %v147
    %v150 = vmul.f32 %v134, %v148
    %v151 = vmul.f32 %v135, %v149
    %v152 = vld [vmem:[%s4] sm:$0x1]
    %v154 = vlaneseq
    %v155 = vshrl.u32 %v154, 7
    %v156 = vsub.s32 0, %v155
    %v157 = vrot.slane %v152, %v156
    %v159 = vmul.f32 %v150, %v157
    %v160 = vmul.f32 %v151, %v157
    %v161 = vld [vmem:[%s5] sm:$0x1]
    %v163 = vlaneseq
    %v164 = vshrl.u32 %v163, 7
    %v165 = vsub.s32 0, %v164
    %v166 = vrot.slane %v161, %v165
    %v168 = vadd.f32 %v159, %v166
    %v169 = vadd.f32 %v160, %v166
    %v170 = vpack.c.bf16 %v169, %v168
    %v172 = vunpack.c.l.b16 %v170
    %v173 = vunpack.c.h.b16 %v170
    %v174 = vpack.c.b16 %v172, %v172
    %v175 = vpack.c.b16 %v173, %v173
    %vm178 = vcmask 257024
    %179 = vst.msk [vmem:[%s6] sm:$0xf] %vm178, %v174
    %180 = vst.msk [vmem:[%s6 + $0x4] sm:$0xf] %vm178, %v175
  $region33: #{model_forward.21} parent=0 // pred_fallthru
    _
  // Predicated region
  $region34: #{model_forward.21} parent=0 // pred_check
    _
  $region35: #{model_forward.21} parent=0 // pred_check_branch
    %182 = sbr.rel (0) target = $region37
  $region36: #{model_forward.21} parent=0 // pred_region
    _
  $region37: #{model_forward.21} parent=0 // pred_fallthru
    _
  // Predicated region
  $region38: #{model_forward.21} parent=0 // pred_check
    _
  $region39: #{model_forward.21} parent=0 // pred_check_branch
    %184 = sbr.rel (0) target = $region41
  $region40: #{model_forward.21} parent=0 // pred_region
    _
  $region41: #{model_forward.21} parent=0 // pred_fallthru
    _

// kernel: model_forward.20
$region0: #{model_forward.20}
  #allocation0 [shape = 'u32[]', space=smem, size = 0x4, offset = 0x4, fixed_abs, tag = 'smem constant byte address 0x4 - core index']
  #allocation1 [shape = 'u32[144,128]{1,0:T(1,128)}', space=vmem, size = 0x12000, scoped, tag = 'internal scratch']
  %s0 = inlined_call_operand.vmem [shape: bf16[2,8,32], index: 0, kind: input, shape index: {}]
  %s1 = inlined_call_operand.vmem [shape: bf16[2,8,32], index: 1, kind: input, shape index: {}]
  %s2 = inlined_call_operand.vmem [shape: bf16[2,8,32], index: 2, kind: input, shape index: {}]
  %s3 = inlined_call_operand.vmem [shape: f32[2,1,8], index: 3, kind: input, shape index: {}]
  %s4 = inlined_call_operand.vmem [shape: bf16[2,8,32], index: 4, kind: output, shape index: {}]
  %s5 = sld [smem:[#allocation0]]
  $region49: #{model_forward.20} parent=0
    _
  %s7 = ssub.s32 1, %s5
  %s8 = scalar_select 0, %s7, %s5
  loop: start=0, step=1, limit=4
  $region2: #{model_forward.20} parent=0 // loop_pre_header
    _
  $region3: #{model_forward.20} parent=0 // loop_header
    %s10 = sphi 0, %s14
    %p11 = scmp.ge.s32.totalorder %s10, 4
    %s17 = sphi 0, %s29
    %s18 = sphi 0, %s25
    %s19 = sphi 0, %s17
    %s20 = sphi 0, %s18
    %s21 = sphi 0, %s19
    %s22 = sphi 0, %s20
    %s34 = sphi 0, %s36
    %s37 = sphi 0, %s34
    %s38 = sphi 0, %s37
    %s54 = sphi 0, %s38
    %s62 = sphi 0, %s64
    %s65 = sphi 0, %s62
    %s66 = sphi 0, %s65
    %s82 = sphi 0, %s66
    %s90 = sphi 0, %s92
    %s93 = sphi 0, %s90
    %s94 = sphi 0, %s93
    %s110 = sphi 0, %s94
    %s116 = sphi 0, %s118
    %s119 = sphi 0, %s116
    %s120 = sphi 0, %s119
    %s136 = sphi 0, %s120
    %s144 = sphi 0, %s146
    %s147 = sphi 0, %s144
    %s148 = sphi 0, %s147
    %s164 = sphi 0, %s148
  $region4: #{model_forward.20} parent=0 // loop_header_branch
    %13 = sbr.rel (%p11) target = $region8
  $region5: #{model_forward.20} parent=0 // loop_body
    %s15 = ssub.s32 %s10, 1
    %s16 = ssub.s32 %s10, 2
    %s23 = sadd.s32 1, %s18
    %p24 = scmp.ge.s32.totalorder %s23, 1
    %s25 = scalar_select %p24, 0, %s23
    %s26 = sadd.s32 1, %s17
    %s27 = scalar_select %p24, %s26, %s17
    %p28 = scmp.ge.s32.totalorder %s27, 2
    %s29 = scalar_select %p28, 0, %s27
    %s30 = ssub.s32 %s17, %s29
    %s31 = ssub.s32 %s18, %s25
    %s32 = sor.u32 %s30, %s31
    %p33 = scmp.eq.s32.totalorder %s32, 0
    %s35 = sadd.s32 %s34, 1
    %s36 = scalar_select %p33, %s34, %s35
    %p39 = pneg %p33
    %p40 = scmp.eq.s32.totalorder %s10, 1
    %p41 = por %p39, %p40
    %p42 = scmp.ne.s32.totalorder %s34, %s37
    %p43 = scmp.eq.s32.totalorder %s10, 0
    %p44 = por %p42, %p43
    %p45 = scmp.ne.s32.totalorder %s34, %s37
    %p46 = scmp.eq.s32.totalorder %s15, 1
    %p47 = por %p45, %p46
    %p48 = scmp.ne.s32.totalorder %s37, %s38
    %p49 = scmp.eq.s32.totalorder %s15, 0
    %p50 = por %p48, %p49
    %p51 = scmp.ne.s32.totalorder %s37, %s38
    %p52 = scmp.eq.s32.totalorder %s16, 1
    %p53 = por %p51, %p52
    %p55 = scmp.ne.s32.totalorder %s38, %s54
    %p56 = scmp.eq.s32.totalorder %s16, 0
    %p57 = por %p55, %p56
    %s58 = ssub.s32 %s17, %s29
    %s59 = ssub.s32 %s18, %s25
    %s60 = sor.u32 %s58, %s59
    %p61 = scmp.eq.s32.totalorder %s60, 0
    %s63 = sadd.s32 %s62, 1
    %s64 = scalar_select %p61, %s62, %s63
    %p67 = pneg %p61
    %p68 = scmp.eq.s32.totalorder %s10, 1
    %p69 = por %p67, %p68
    %p70 = scmp.ne.s32.totalorder %s62, %s65
    %p71 = scmp.eq.s32.totalorder %s10, 0
    %p72 = por %p70, %p71
    %p73 = scmp.ne.s32.totalorder %s62, %s65
    %p74 = scmp.eq.s32.totalorder %s15, 1
    %p75 = por %p73, %p74
    %p76 = scmp.ne.s32.totalorder %s65, %s66
    %p77 = scmp.eq.s32.totalorder %s15, 0
    %p78 = por %p76, %p77
    %p79 = scmp.ne.s32.totalorder %s65, %s66
    %p80 = scmp.eq.s32.totalorder %s16, 1
    %p81 = por %p79, %p80
    %p83 = scmp.ne.s32.totalorder %s66, %s82
    %p84 = scmp.eq.s32.totalorder %s16, 0
    %p85 = por %p83, %p84
    %s86 = ssub.s32 %s17, %s29
    %s87 = ssub.s32 %s18, %s25
    %s88 = sor.u32 %s86, %s87
    %p89 = scmp.eq.s32.totalorder %s88, 0
    %s91 = sadd.s32 %s90, 1
    %s92 = scalar_select %p89, %s90, %s91
    %p95 = pneg %p89
    %p96 = scmp.eq.s32.totalorder %s10, 1
    %p97 = por %p95, %p96
    %p98 = scmp.ne.s32.totalorder %s90, %s93
    %p99 = scmp.eq.s32.totalorder %s10, 0
    %p100 = por %p98, %p99
    %p101 = scmp.ne.s32.totalorder %s90, %s93
    %p102 = scmp.eq.s32.totalorder %s15, 1
    %p103 = por %p101, %p102
    %p104 = scmp.ne.s32.totalorder %s93, %s94
    %p105 = scmp.eq.s32.totalorder %s15, 0
    %p106 = por %p104, %p105
    %p107 = scmp.ne.s32.totalorder %s93, %s94
    %p108 = scmp.eq.s32.totalorder %s16, 1
    %p109 = por %p107, %p108
    %p111 = scmp.ne.s32.totalorder %s94, %s110
    %p112 = scmp.eq.s32.totalorder %s16, 0
    %p113 = por %p111, %p112
    %s114 = ssub.s32 %s17, %s29
    %p115 = scmp.eq.s32.totalorder %s114, 0
    %s117 = sadd.s32 %s116, 1
    %s118 = scalar_select %p115, %s116, %s117
    %p121 = pneg %p115
    %p122 = scmp.eq.s32.totalorder %s10, 1
    %p123 = por %p121, %p122
    %p124 = scmp.ne.s32.totalorder %s116, %s119
    %p125 = scmp.eq.s32.totalorder %s10, 0
    %p126 = por %p124, %p125
    %p127 = scmp.ne.s32.totalorder %s116, %s119
    %p128 = scmp.eq.s32.totalorder %s15, 1
    %p129 = por %p127, %p128
    %p130 = scmp.ne.s32.totalorder %s119, %s120
    %p131 = scmp.eq.s32.totalorder %s15, 0
    %p132 = por %p130, %p131
    %p133 = scmp.ne.s32.totalorder %s119, %s120
    %p134 = scmp.eq.s32.totalorder %s16, 1
    %p135 = por %p133, %p134
    %p137 = scmp.ne.s32.totalorder %s120, %s136
    %p138 = scmp.eq.s32.totalorder %s16, 0
    %p139 = por %p137, %p138
    %s140 = ssub.s32 %s17, %s29
    %s141 = ssub.s32 %s18, %s25
    %s142 = sor.u32 %s140, %s141
    %p143 = scmp.eq.s32.totalorder %s142, 0
    %s145 = sadd.s32 %s144, 1
    %s146 = scalar_select %p143, %s144, %s145
    %p149 = pneg %p143
    %p150 = scmp.eq.s32.totalorder %s10, 1
    %p151 = por %p149, %p150
    %p152 = scmp.ne.s32.totalorder %s144, %s147
    %p153 = scmp.eq.s32.totalorder %s10, 0
    %p154 = por %p152, %p153
    %p155 = scmp.ne.s32.totalorder %s144, %s147
    %p156 = scmp.eq.s32.totalorder %s15, 1
    %p157 = por %p155, %p156
    %p158 = scmp.ne.s32.totalorder %s147, %s148
    %p159 = scmp.eq.s32.totalorder %s15, 0
    %p160 = por %p158, %p159
    %p161 = scmp.ne.s32.totalorder %s147, %s148
    %p162 = scmp.eq.s32.totalorder %s16, 1
    %p163 = por %p161, %p162
    %p165 = scmp.ne.s32.totalorder %s148, %s164
    %p166 = scmp.eq.s32.totalorder %s16, 0
    %p167 = por %p165, %p166
    %p168 = scmp.le.s32.totalorder 1, %s10
    %p169 = scmp.lt.s32.totalorder %s10, 3
    %p170 = pnand %p168, %p169
    %p171 = pneg %p170
    // Predicated region
    $region9: #{model_forward.20} parent=5 // pred_check
      _
    $region10: #{model_forward.20} parent=5 // pred_check_branch
      %173 = sbr.rel (%p170) target = $region12
    $region11: #{model_forward.20} parent=5 // pred_region
      %s174 = ssub.s32 %s10, 1
    $region12: #{model_forward.20} parent=5 // pred_fallthru
      _
    %p175 = scmp.lt.s32.totalorder %s10, 2
    // Predicated region
    $region13: #{model_forward.20} parent=5 // pred_check
      %p176 = pneg %p175
    $region14: #{model_forward.20} parent=5 // pred_check_branch
      %178 = sbr.rel (%p176) target = $region16
    $region15: #{model_forward.20} parent=5 // pred_region
      // Predicated region
      $region17: #{model_forward.20} parent=15 // pred_check
        %p179 = pneg %p44
      $region18: #{model_forward.20} parent=15 // pred_check_branch
        %181 = sbr.rel (%p179) target = $region20
      $region19: #{model_forward.20} parent=15 // pred_region
        %p182 = scmp.lt.s32.totalorder %s17, 1
        %s183 = scalar_select %p182, %s17, 1
        %p184 = scmp.lt.s32.totalorder %s18, 0
        %s185 = scalar_select %p184, %s18, 0
        %s186 = sadd.s32 %s185, %s183
        %s187 = smul.addr %s186, 4
        %s188 = scalar_lea.vmem %s0, %s187
      $region20: #{model_forward.20} parent=15 // pred_fallthru
        _
      // Predicated region
      $region21: #{model_forward.20} parent=15 // pred_check
        %p189 = pneg %p72
      $region22: #{model_forward.20} parent=15 // pred_check_branch
        %191 = sbr.rel (%p189) target = $region24
      $region23: #{model_forward.20} parent=15 // pred_region
        %p192 = scmp.lt.s32.totalorder %s17, 1
        %s193 = scalar_select %p192, %s17, 1
        %p194 = scmp.lt.s32.totalorder %s18, 0
        %s195 = scalar_select %p194, %s18, 0
        %s196 = sadd.s32 %s195, %s193
        %s197 = smul.addr %s196, 4
        %s198 = scalar_lea.vmem %s1, %s197
      $region24: #{model_forward.20} parent=15 // pred_fallthru
        _
      // Predicated region
      $region25: #{model_forward.20} parent=15 // pred_check
        %p199 = pneg %p100
      $region26: #{model_forward.20} parent=15 // pred_check_branch
        %201 = sbr.rel (%p199) target = $region28
      $region27: #{model_forward.20} parent=15 // pred_region
        %p202 = scmp.lt.s32.totalorder %s17, 1
        %s203 = scalar_select %p202, %s17, 1
        %p204 = scmp.lt.s32.totalorder %s18, 0
        %s205 = scalar_select %p204, %s18, 0
        %s206 = sadd.s32 %s205, %s203
        %s207 = smul.addr %s206, 4
        %s208 = scalar_lea.vmem %s2, %s207
      $region28: #{model_forward.20} parent=15 // pred_fallthru
        _
      // Predicated region
      $region29: #{model_forward.20} parent=15 // pred_check
        %p209 = pneg %p126
      $region30: #{model_forward.20} parent=15 // pred_check_branch
        %211 = sbr.rel (%p209) target = $region32
      $region31: #{model_forward.20} parent=15 // pred_region
        %p212 = scmp.lt.s32.totalorder %s17, 1
        %s213 = scalar_select %p212, %s17, 1
        %s214 = scalar_lea.vmem %s3, %s213
      $region32: #{model_forward.20} parent=15 // pred_fallthru
        _
    $region16: #{model_forward.20} parent=5 // pred_fallthru
      _
    %p215 = scmp.le.s32.totalorder 1, %s10
    %p216 = scmp.lt.s32.totalorder %s10, 3
    %p217 = pnand %p215, %p216
    %p218 = pneg %p217
    // Predicated region
    $region33: #{model_forward.20} parent=5 // pred_check
      _
    $region34: #{model_forward.20} parent=5 // pred_check_branch
      %220 = sbr.rel (%p217) target = $region36
    $region35: #{model_forward.20} parent=5 // pred_region
      %s221 = ssub.s32 %s10, 1
      %p222 = scmp.lt.s32.totalorder %s19, 1
      %s223 = scalar_select %p222, %s19, 1
      %p224 = scmp.lt.s32.totalorder %s20, 0
      %s225 = scalar_select %p224, %s20, 0
      %s226 = sadd.s32 %s225, %s223
      %s227 = smul.addr %s226, 4
      %s228 = scalar_lea.vmem %s0, %s227
      %p229 = pneg %p50
      %p230 = pneg %p47
      %p231 = scmp.lt.s32.totalorder %s19, 1
      %s232 = scalar_select %p231, %s19, 1
      %p233 = scmp.lt.s32.totalorder %s20, 0
      %s234 = scalar_select %p233, %s20, 0
      %s235 = sadd.s32 %s234, %s232
      %s236 = smul.addr %s235, 4
      %s237 = scalar_lea.vmem %s1, %s236
      %p238 = pneg %p78
      %p239 = pneg %p75
      %p240 = scmp.lt.s32.totalorder %s19, 1
      %s241 = scalar_select %p240, %s19, 1
      %p242 = scmp.lt.s32.totalorder %s20, 0
      %s243 = scalar_select %p242, %s20, 0
      %s244 = sadd.s32 %s243, %s241
      %s245 = smul.addr %s244, 4
      %s246 = scalar_lea.vmem %s2, %s245
      %p247 = pneg %p106
      %p248 = pneg %p103
      %p249 = scmp.lt.s32.totalorder %s19, 1
      %s250 = scalar_select %p249, %s19, 1
      %s251 = scalar_lea.vmem %s3, %s250
      %p252 = pneg %p132
      %p253 = pneg %p129
      %p254 = pneg %p160
      %p255 = pneg %p157
      %p256 = scmp.lt.s32.totalorder %s19, 1
      %s257 = scalar_select %p256, %s19, 1
      %p258 = scmp.lt.s32.totalorder %s20, 0
      %s259 = scalar_select %p258, %s20, 0
      %s260 = sadd.s32 %s259, %s257
      %s261 = smul.addr %s260, 4
      %s262 = scalar_lea.vmem %s4, %s261
      %p263 = scmp.lt.s32.totalorder %s19, 1
      %s264 = scalar_select %p263, %s19, 1
      %p265 = scmp.lt.s32.totalorder %s20, 0
      %s266 = scalar_select %p265, %s20, 0
      %s267 = sadd.s32 %s266, %s264
      %s268 = smul.addr %s267, 4
      %s269 = scalar_lea.vmem %s0, %s268
      %p270 = scmp.lt.s32.totalorder %s19, 1
      %s271 = scalar_select %p270, %s19, 1
      %p272 = scmp.lt.s32.totalorder %s20, 0
      %s273 = scalar_select %p272, %s20, 0
      %s274 = sadd.s32 %s273, %s271
      %s275 = smul.addr %s274, 4
      %s276 = scalar_lea.vmem %s1, %s275
      %p277 = scmp.lt.s32.totalorder %s19, 1
      %s278 = scalar_select %p277, %s19, 1
      %p279 = scmp.lt.s32.totalorder %s20, 0
      %s280 = scalar_select %p279, %s20, 0
      %s281 = sadd.s32 %s280, %s278
      %s282 = smul.addr %s281, 4
      %s283 = scalar_lea.vmem %s2, %s282
      %p284 = scmp.lt.s32.totalorder %s19, 1
      %s285 = scalar_select %p284, %s19, 1
      %s286 = scalar_lea.vmem %s3, %s285
      %p287 = scmp.lt.s32.totalorder %s19, 1
      %s288 = scalar_select %p287, %s19, 1
      %p289 = scmp.lt.s32.totalorder %s20, 0
      %s290 = scalar_select %p289, %s20, 0
      %s291 = sadd.s32 %s290, %s288
      %s292 = smul.addr %s291, 4
      %s293 = scalar_lea.vmem %s4, %s292
      %v295 = vld [vmem:[%s286] sm:$0x1]
      %v296 = vld [vmem:[%s269] sm:$0xf]
      %v297 = vld [vmem:[%s276] sm:$0xf]
      %v298 = vld [vmem:[%s283] sm:$0xf]
      %vm299 = vcmask 130048
      %v301 = vsel %vm299, %v296, 0
      %v304 = vsel %vm299, %v297, 0
      %306 = vmatprep.subr.bf16.mxu0 0
      %307 = vmatpush1.bf16.xpose.msra.mxu0 %v304
      %308 = vmatprep.subr.bf16.mxu0 0
      %309 = vmatpush1.bf16.xpose.msra.mxu0 0
      %310 = vmatprep.subr.bf16.mxu0 0
      %311 = vmatpush1.bf16.xpose.msra.mxu0 0
      %312 = vmatprep.subr.bf16.mxu0 0
      %313 = vmatpush1.bf16.xpose.msra.mxu0 0
      %314 = vmatprep.subr.bf16.mxu0 0
      %315 = vmatpush1.bf16.xpose.msra.mxu0 0
      %316 = vmatprep.subr.bf16.mxu0 0
      %317 = vmatpush1.bf16.xpose.msra.mxu0 0
      %318 = vmatprep.subr.bf16.mxu0 0
      %319 = vmatpush1.bf16.xpose.msra.mxu0 0
      %320 = vmatprep.subr.bf16.mxu0 0
      %321 = vmatpush1.bf16.xpose.msra.mxu0 0
      %322 = vmatprep.subr.bf16.mxu0 0
      %323 = vmatpush1.bf16.xpose.msra.mxu0 0
      %324 = vmatprep.subr.bf16.mxu0 0
      %325 = vmatpush1.bf16.xpose.msra.mxu0 0
      %326 = vmatprep.subr.bf16.mxu0 0
      %327 = vmatpush1.bf16.xpose.msra.mxu0 0
      %328 = vmatprep.subr.bf16.mxu0 0
      %329 = vmatpush1.bf16.xpose.msra.mxu0 0
      %330 = vmatprep.subr.bf16.mxu0 0
      %331 = vmatpush1.bf16.xpose.msra.mxu0 0
      %332 = vmatprep.subr.bf16.mxu0 0
      %333 = vmatpush1.bf16.xpose.msra.mxu0 0
      %334 = vmatprep.subr.bf16.mxu0 0
      %335 = vmatpush1.bf16.xpose.msra.mxu0 0
      %336 = vmatprep.subr.bf16.mxu0 0
      %337 = vmatpush1.bf16.xpose.msra.mxu0 0
      %338 = vmatprep.mubr.bf16.mxu0 0
      %339 = vmatmul.mubr.bf16.gmra.mrb[0].mxu0 %v301
      %v340 = vpop.f32.mrb[0].mxu0
      %v341 = vadd.f32 0.0, %v340
      %v342 = vpop.f32.mrb[0].mxu0
      %v343 = vpop.f32.mrb[0].mxu0
      %v344 = vpop.f32.mrb[0].mxu0
      %345 = vdwg.mxu0
      %v346 = vmul.f32 %v341, 0.36067376
      %v348 = vlaneseq
      %v349 = vshrl.u32 %v348, 7
      %v350 = vsub.s32 0, %v349
      %v351 = vrot.slane %v295, %v350
      %v353 = vadd.f32 %v346, %v351
      %vm354 = vcmask 64512
      %v355 = vsel %vm354, %v353, -inf
      %356 = vmax.xlane.f32.xlu0 %v355
      %v357 = vpop.xlane.xlu0 %356
      %v358 = vsub.f32 %v353, %v357
      %v359 = vpow.pop %v358
      %v360 = vsel %vm354, %v359, 0.0
      %361 = vadd.xlane.f32.xlu0 %v360
      %v362 = vpop.xlane.xlu0 %361
      %v363 = vpack.c.bf16 %v359, %v359
      %v365 = vsel %vm354, %v363, 0
      %vm367 = vcmask 1043456
      %v369 = vsel %vm367, %v298, 0
      %371 = vmatprep.subr.bf16.mxu0 0
      %372 = vmatpush1.bf16.msra.mxu0 %v369
      %373 = vmatprep.subr.bf16.mxu0 0
      %374 = vmatpush1.bf16.msra.mxu0 0
      %375 = vmatprep.subr.bf16.mxu0 0
      %376 = vmatpush1.bf16.msra.mxu0 0
      %377 = vmatprep.subr.bf16.mxu0 0
      %378 = vmatpush1.bf16.msra.mxu0 0
      %379 = vmatprep.subr.bf16.mxu0 0
      %380 = vmatpush1.bf16.msra.mxu0 0
      %381 = vmatprep.subr.bf16.mxu0 0
      %382 = vmatpush1.bf16.msra.mxu0 0
      %383 = vmatprep.subr.bf16.mxu0 0
      %384 = vmatpush1.bf16.msra.mxu0 0
      %385 = vmatprep.subr.bf16.mxu0 0
      %386 = vmatpush1.bf16.msra.mxu0 0
      %387 = vmatprep.subr.bf16.mxu0 0
      %388 = vmatpush1.bf16.msra.mxu0 0
      %389 = vmatprep.subr.bf16.mxu0 0
      %390 = vmatpush1.bf16.msra.mxu0 0
      %391 = vmatprep.subr.bf16.mxu0 0
      %392 = vmatpush1.bf16.msra.mxu0 0
      %393 = vmatprep.subr.bf16.mxu0 0
      %394 = vmatpush1.bf16.msra.mxu0 0
      %395 = vmatprep.subr.bf16.mxu0 0
      %396 = vmatpush1.bf16.msra.mxu0 0
      %397 = vmatprep.subr.bf16.mxu0 0
      %398 = vmatpush1.bf16.msra.mxu0 0
      %399 = vmatprep.subr.bf16.mxu0 0
      %400 = vmatpush1.bf16.msra.mxu0 0
      %401 = vmatprep.subr.bf16.mxu0 0
      %402 = vmatpush1.bf16.msra.mxu0 0
      %403 = vmatprep.mubr.bf16.mxu0 0
      %404 = vmatmul.mubr.bf16.gmra.mrb[0].mxu0 %v365
      %v405 = vpop.f32.mrb[0].mxu0
      %v406 = vadd.f32 0.0, %v405
      %v407 = vpop.f32.mrb[0].mxu0
      %v408 = vpop.f32.mrb[0].mxu0
      %v409 = vpop.f32.mrb[0].mxu0
      %410 = vdwg.mxu0
      %v411 = vrcp.pop %v362
      %v412 = vmul.f32 %v406, %v411
      %v414 = vunpack.c.l.b16 %v296
      %v415 = vpack.c.b16 %v414, %v414
      %416 = vrot.lane.b32.xlu0 %v415, 112
      %v417 = vpop.permute.xlu0 %416
      %v419 = vunpack.c.l.b16 %v297
      %v420 = vpack.c.b16 %v419, %v419
      %421 = vrot.lane.b32.xlu0 %v420, 112
      %v422 = vpop.permute.xlu0 %421
      %v424 = vsel %vm299, %v417, 0
      %v427 = vsel %vm299, %v422, 0
      %429 = vmatprep.subr.bf16.mxu0 0
      %430 = vmatpush1.bf16.xpose.msra.mxu0 %v427
      %431 = vmatprep.subr.bf16.mxu0 0
      %432 = vmatpush1.bf16.xpose.msra.mxu0 0
      %433 = vmatprep.subr.bf16.mxu0 0
      %434 = vmatpush1.bf16.xpose.msra.mxu0 0
      %435 = vmatprep.subr.bf16.mxu0 0
      %436 = vmatpush1.bf16.xpose.msra.mxu0 0
      %437 = vmatprep.subr.bf16.mxu0 0
      %438 = vmatpush1.bf16.xpose.msra.mxu0 0
      %439 = vmatprep.subr.bf16.mxu0 0
      %440 = vmatpush1.bf16.xpose.msra.mxu0 0
      %441 = vmatprep.subr.bf16.mxu0 0
      %442 = vmatpush1.bf16.xpose.msra.mxu0 0
      %443 = vmatprep.subr.bf16.mxu0 0
      %444 = vmatpush1.bf16.xpose.msra.mxu0 0
      %445 = vmatprep.subr.bf16.mxu0 0
      %446 = vmatpush1.bf16.xpose.msra.mxu0 0
      %447 = vmatprep.subr.bf16.mxu0 0
      %448 = vmatpush1.bf16.xpose.msra.mxu0 0
      %449 = vmatprep.subr.bf16.mxu0 0
      %450 = vmatpush1.bf16.xpose.msra.mxu0 0
      %451 = vmatprep.subr.bf16.mxu0 0
      %452 = vmatpush1.bf16.xpose.msra.mxu0 0
      %453 = vmatprep.subr.bf16.mxu0 0
      %454 = vmatpush1.bf16.xpose.msra.mxu0 0
      %455 = vmatprep.subr.bf16.mxu0 0
      %456 = vmatpush1.bf16.xpose.msra.mxu0 0
      %457 = vmatprep.subr.bf16.mxu0 0
      %458 = vmatpush1.bf16.xpose.msra.mxu0 0
      %459 = vmatprep.subr.bf16.mxu0 0
      %460 = vmatpush1.bf16.xpose.msra.mxu0 0
      %461 = vmatprep.mubr.bf16.mxu0 0
      %462 = vmatmul.mubr.bf16.gmra.mrb[0].mxu0 %v424
      %v463 = vpop.f32.mrb[0].mxu0
      %v464 = vadd.f32 0.0, %v463
      %v465 = vpop.f32.mrb[0].mxu0
      %v466 = vpop.f32.mrb[0].mxu0
      %v467 = vpop.f32.mrb[0].mxu0
      %468 = vdwg.mxu0
      %v469 = vmul.f32 %v464, 0.36067376
      %v470 = vadd.f32 %v469, %v351
      %v471 = vsel %vm354, %v470, -inf
      %472 = vmax.xlane.f32.xlu0 %v471
      %v473 = vpop.xlane.xlu0 %472
      %v474 = vsub.f32 %v470, %v473
      %v475 = vpow.pop %v474
      %v476 = vsel %vm354, %v475, 0.0
      %477 = vadd.xlane.f32.xlu0 %v476
      %v478 = vpop.xlane.xlu0 %477
      %v479 = vpack.c.bf16 %v475, %v475
      %v481 = vunpack.c.l.b16 %v298
      %v482 = vpack.c.b16 %v481, %v481
      %483 = vrot.lane.b32.xlu0 %v482, 112
      %v484 = vpop.permute.xlu0 %483
      %v486 = vsel %vm354, %v479, 0
      %v489 = vsel %vm367, %v484, 0
      %491 = vmatprep.subr.bf16.mxu0 0
      %492 = vmatpush1.bf16.msra.mxu0 %v489
      %493 = vmatprep.subr.bf16.mxu0 0
      %494 = vmatpush1.bf16.msra.mxu0 0
      %495 = vmatprep.subr.bf16.mxu0 0
      %496 = vmatpush1.bf16.msra.mxu0 0
      %497 = vmatprep.subr.bf16.mxu0 0
      %498 = vmatpush1.bf16.msra.mxu0 0
      %499 = vmatprep.subr.bf16.mxu0 0
      %500 = vmatpush1.bf16.msra.mxu0 0
      %501 = vmatprep.subr.bf16.mxu0 0
      %502 = vmatpush1.bf16.msra.mxu0 0
      %503 = vmatprep.subr.bf16.mxu0 0
      %504 = vmatpush1.bf16.msra.mxu0 0
      %505 = vmatprep.subr.bf16.mxu0 0
      %506 = vmatpush1.bf16.msra.mxu0 0
      %507 = vmatprep.subr.bf16.mxu0 0
      %508 = vmatpush1.bf16.msra.mxu0 0
      %509 = vmatprep.subr.bf16.mxu0 0
      %510 = vmatpush1.bf16.msra.mxu0 0
      %511 = vmatprep.subr.bf16.mxu0 0
      %512 = vmatpush1.bf16.msra.mxu0 0
      %513 = vmatprep.subr.bf16.mxu0 0
      %514 = vmatpush1.bf16.msra.mxu0 0
      %515 = vmatprep.subr.bf16.mxu0 0
      %516 = vmatpush1.bf16.msra.mxu0 0
      %517 = vmatprep.subr.bf16.mxu0 0
      %518 = vmatpush1.bf16.msra.mxu0 0
      %519 = vmatprep.subr.bf16.mxu0 0
      %520 = vmatpush1.bf16.msra.mxu0 0
      %521 = vmatprep.subr.bf16.mxu0 0
      %522 = vmatpush1.bf16.msra.mxu0 0
      %523 = vmatprep.mubr.bf16.mxu0 0
      %524 = vmatmul.mubr.bf16.gmra.mrb[0].mxu0 %v486
      %v525 = vpop.f32.mrb[0].mxu0
      %v526 = vadd.f32 0.0, %v525
      %v527 = vpop.f32.mrb[0].mxu0
      %v528 = vpop.f32.mrb[0].mxu0
      %v529 = vpop.f32.mrb[0].mxu0
      %530 = vdwg.mxu0
      %v531 = vrcp.pop %v478
      %v532 = vmul.f32 %v526, %v531
      %534 = vrot.lane.b32.xlu0 %v532, 16
      %v535 = vpop.permute.xlu0 %534
      %v537 = vsel %vm299, %v412, %v535
      %v538 = vpack.c.bf16 %v537, %v537
      %vm539 = vcmask 257024
      %540 = vst.msk [vmem:[%s293] sm:$0xf] %vm539, %v538
      %p541 = scmp.lt.s32.totalorder %s19, 1
      %s542 = scalar_select %p541, %s19, 1
      %p543 = scmp.lt.s32.totalorder %s20, 0
      %s544 = scalar_select %p543, %s20, 0
      %s545 = sadd.s32 %s544, %s542
      %s546 = smul.addr %s545, 4
      %s547 = scalar_lea.vmem %s4, %s546
      // Predicated region
      $region37: #{model_forward.20} parent=35 // pred_check
        %p548 = pneg %p157
      $region38: #{model_forward.20} parent=35 // pred_check_branch
        %550 = sbr.rel (%p548) target = $region40
      $region39: #{model_forward.20} parent=35 // pred_region
        _
      $region40: #{model_forward.20} parent=35 // pred_fallthru
        _
    $region36: #{model_forward.20} parent=5 // pred_fallthru
      _
    %p551 = scmp.le.s32.totalorder 2, %s10
    // Predicated region
    $region41: #{model_forward.20} parent=5 // pred_check
      %p552 = pneg %p551
    $region42: #{model_forward.20} parent=5 // pred_check_branch
      %554 = sbr.rel (%p552) target = $region44
    $region43: #{model_forward.20} parent=5 // pred_region
      %s555 = ssub.s32 %s10, 2
      // Predicated region
      $region45: #{model_forward.20} parent=43 // pred_check
        %p556 = pneg %p163
      $region46: #{model_forward.20} parent=43 // pred_check_branch
        %558 = sbr.rel (%p556) target = $region48
      $region47: #{model_forward.20} parent=43 // pred_region
        %p559 = scmp.lt.s32.totalorder %s21, 1
        %s560 = scalar_select %p559, %s21, 1
        %p561 = scmp.lt.s32.totalorder %s22, 0
        %s562 = scalar_select %p561, %s22, 0
        %s563 = sadd.s32 %s562, %s560
        %s564 = smul.addr %s563, 4
        %s565 = scalar_lea.vmem %s4, %s564
      $region48: #{model_forward.20} parent=43 // pred_fallthru
        _
    $region44: #{model_forward.20} parent=5 // pred_fallthru
      _
  $region6: #{model_forward.20} parent=0 // loop_footer
    %s14 = sadd.s32 1, %s10
  $region7: #{model_forward.20} parent=0 // loop_footer_branch
    %9 = sbr.rel target = $region3
  $region8: #{model_forward.20} parent=0 // loop_exit
    _

// kernel: model_forward.22
$region0: #{model_forward.22}
  #allocation0 [shape = 'u32[]', space=smem, size = 0x4, offset = 0x4, fixed_abs, tag = 'smem constant byte address 0x4 - core index']
  #allocation1 [shape = 'u32[144,128]{1,0:T(1,128)}', space=vmem, size = 0x12000, scoped, tag = 'internal scratch']
  #allocation2 [shape = 'f32[16,64]{1,0:T(8,128)}', space=vmem, size = 0x2000, scoped, tag = 'scratch operand']
  %s0 = inlined_call_operand.vmem [shape: bf16[16,32], index: 0, kind: input, shape index: {}]
  %s1 = inlined_call_operand.vmem [shape: bf16[32,64], index: 1, kind: input, shape index: {}]
  %s2 = inlined_call_operand.vmem [shape: f32[1,64], index: 2, kind: input, shape index: {}]
  %s3 = inlined_call_operand.vmem [shape: bf16[16,64], index: 3, kind: output, shape index: {}]
  %s4 = sld [smem:[#allocation0]]
  $region30: #{model_forward.22} parent=0
    _
  %s6 = ssub.s32 1, %s4
  %s7 = scalar_select 0, %s6, %s4
  // Predicated region
  $region2: #{model_forward.22} parent=0 // pred_check
    _
  $region3: #{model_forward.22} parent=0 // pred_check_branch
    %9 = sbr.rel (0) target = $region5
  $region4: #{model_forward.22} parent=0 // pred_region
    _
  $region5: #{model_forward.22} parent=0 // pred_fallthru
    _
  // Predicated region
  $region6: #{model_forward.22} parent=0 // pred_check
    _
  $region7: #{model_forward.22} parent=0 // pred_check_branch
    %11 = sbr.rel (0) target = $region9
  $region8: #{model_forward.22} parent=0 // pred_region
    _
  $region9: #{model_forward.22} parent=0 // pred_fallthru
    _
  // Predicated region
  $region10: #{model_forward.22} parent=0 // pred_check
    _
  $region11: #{model_forward.22} parent=0 // pred_check_branch
    %13 = sbr.rel (0) target = $region13
  $region12: #{model_forward.22} parent=0 // pred_region
    _
  $region13: #{model_forward.22} parent=0 // pred_fallthru
    _
  %p15 = scmp.eq.s32.totalorder 0, 0
  // Predicated region
  $region14: #{model_forward.22} parent=0 // pred_check
    %p16 = pneg %p15
  $region15: #{model_forward.22} parent=0 // pred_check_branch
    %18 = sbr.rel (%p16) target = $region17
  $region16: #{model_forward.22} parent=0 // pred_region
    %vm19 = vcmask 523264
    %20 = vst.msk [vmem:[#allocation2] sm:$0xff] %vm19, 0.0
    %21 = vst.msk [vmem:[#allocation2 + $0x8] sm:$0xff] %vm19, 0.0
  $region17: #{model_forward.22} parent=0 // pred_fallthru
    _
  %v22 = vld [vmem:[#allocation2] sm:$0xff]
  %v23 = vld [vmem:[#allocation2 + $0x8] sm:$0xff]
  %v24 = vld [vmem:[%s0] sm:$0xf]
  %v25 = vld [vmem:[%s0 + $0x4] sm:$0xf]
  %v26 = vld [vmem:[%s1] sm:$0xf]
  %v27 = vld [vmem:[%s1 + $0x4] sm:$0xf]
  %v28 = vld [vmem:[%s1 + $0x8] sm:$0xf]
  %v29 = vld [vmem:[%s1 + $0xc] sm:$0xf]
  %v32 = vunpack.c.l.b16 %v24
  %v33 = vunpack.c.l.b16 %v25
  %v34 = vpack.c.b16 %v33, %v32
  %v39 = vunpack.c.l.b16 %v26
  %v40 = vunpack.c.l.b16 %v27
  %v41 = vunpack.c.l.b16 %v28
  %v42 = vunpack.c.l.b16 %v29
  %v43 = vpack.c.b16 %v40, %v39
  %v44 = vpack.c.b16 %v42, %v41
  %vm47 = vcmask 261120
  %v49 = vsel %vm47, %v34, 0
  %51 = vmatprep.subr.bf16.mxu0 0
  %52 = vmatpush1.bf16.msra.mxu0 %v43
  %53 = vmatprep.subr.bf16.mxu0 0
  %54 = vmatpush1.bf16.msra.mxu0 %v44
  %55 = vmatprep.subr.bf16.mxu0 0
  %56 = vmatpush1.bf16.msra.mxu0 0
  %57 = vmatprep.subr.bf16.mxu0 0
  %58 = vmatpush1.bf16.msra.mxu0 0
  %59 = vmatprep.subr.bf16.mxu0 0
  %60 = vmatpush1.bf16.msra.mxu0 0
  %61 = vmatprep.subr.bf16.mxu0 0
  %62 = vmatpush1.bf16.msra.mxu0 0
  %63 = vmatprep.subr.bf16.mxu0 0
  %64 = vmatpush1.bf16.msra.mxu0 0
  %65 = vmatprep.subr.bf16.mxu0 0
  %66 = vmatpush1.bf16.msra.mxu0 0
  %67 = vmatprep.subr.bf16.mxu0 0
  %68 = vmatpush1.bf16.msra.mxu0 0
  %69 = vmatprep.subr.bf16.mxu0 0
  %70 = vmatpush1.bf16.msra.mxu0 0
  %71 = vmatprep.subr.bf16.mxu0 0
  %72 = vmatpush1.bf16.msra.mxu0 0
  %73 = vmatprep.subr.bf16.mxu0 0
  %74 = vmatpush1.bf16.msra.mxu0 0
  %75 = vmatprep.subr.bf16.mxu0 0
  %76 = vmatpush1.bf16.msra.mxu0 0
  %77 = vmatprep.subr.bf16.mxu0 0
  %78 = vmatpush1.bf16.msra.mxu0 0
  %79 = vmatprep.subr.bf16.mxu0 0
  %80 = vmatpush1.bf16.msra.mxu0 0
  %81 = vmatprep.subr.bf16.mxu0 0
  %82 = vmatpush1.bf16.msra.mxu0 0
  %83 = vmatprep.mubr.bf16.mxu0 0
  %84 = vmatmul.mubr.bf16.gmra.mrb[0].mxu0 %v49
  %v85 = vpop.f32.mrb[0].mxu0
  %v86 = vadd.f32 0.0, %v85
  %v87 = vpop.f32.mrb[0].mxu0
  %v88 = vpop.f32.mrb[0].mxu0
  %v89 = vadd.f32 0.0, %v88
  %v90 = vpop.f32.mrb[0].mxu0
  %91 = vdwg.mxu0
  %v92 = vadd.f32 %v22, %v86
  %v93 = vadd.f32 %v23, %v89
  %vm94 = vcmask 523264
  %95 = vst.msk [vmem:[#allocation2] sm:$0xff] %vm94, %v92
  %96 = vst.msk [vmem:[#allocation2 + $0x8] sm:$0xff] %vm94, %v93
  // Predicated region
  $region18: #{model_forward.22} parent=0 // pred_check
    %p97 = pneg %p15
  $region19: #{model_forward.22} parent=0 // pred_check_branch
    %99 = sbr.rel (%p97) target = $region21
  $region20: #{model_forward.22} parent=0 // pred_region
    %v100 = vld [vmem:[#allocation2] sm:$0xff]
    %v101 = vld [vmem:[#allocation2 + $0x8] sm:$0xff]
    %v102 = vld [vmem:[%s2] sm:$0x1]
    %v104 = vlaneseq
    %v105 = vshrl.u32 %v104, 7
    %v106 = vsub.s32 0, %v105
    %v107 = vrot.slane %v102, %v106
    %v109 = vadd.f32 %v100, %v107
    %v110 = vadd.f32 %v101, %v107
    %v111 = vmul.f32 %v109, 0.5
    %v112 = vmul.f32 %v110, 0.5
    %v113 = vmul.f32 %v109, 0.044715
    %v114 = vmul.f32 %v110, 0.044715
    %v115 = vmul.f32 %v113, %v109
    %v116 = vmul.f32 %v114, %v110
    %v117 = vmul.f32 %v115, %v109
    %v118 = vmul.f32 %v116, %v110
    %v119 = vadd.f32 %v109, %v117
    %v120 = vadd.f32 %v110, %v118
    %v121 = vmul.f32 %v119, 0.7978846
    %v122 = vmul.f32 %v120, 0.7978846
    %v123 = vtanh.pop %v121
    %v124 = vtanh.pop %v122
    %v125 = vadd.f32 %v123, 1.0
    %v126 = vadd.f32 %v124, 1.0
    %v127 = vmul.f32 %v111, %v125
    %v128 = vmul.f32 %v112, %v126
    %v129 = vpack.c.bf16 %v128, %v127
    %v131 = vunpack.c.l.b16 %v129
    %v132 = vunpack.c.h.b16 %v129
    %v133 = vpack.c.b16 %v131, %v131
    %v134 = vpack.c.b16 %v132, %v132
    %vm137 = vcmask 519168
    %138 = vst.msk [vmem:[%s3] sm:$0xf] %vm137, %v133
    %139 = vst.msk [vmem:[%s3 + $0x4] sm:$0xf] %vm137, %v134
  $region21: #{model_forward.22} parent=0 // pred_fallthru
    _
  // Predicated region
  $region22: #{model_forward.22} parent=0 // pred_check
    _
  $region23: #{model_forward.22} parent=0 // pred_check_branch
    %141 = sbr.rel (0) target = $region25
  $region24: #{model_forward.22} parent=0 // pred_region
    _
  $region25: #{model_forward.22} parent=0 // pred_fallthru
    _
  // Predicated region
  $region26: #{model_forward.22} parent=0 // pred_check
    _
  $region27: #{model_forward.22} parent=0 // pred_check_branch
    %143 = sbr.rel (0) target = $region29
  $region28: #{model_forward.22} parent=0 // pred_region
    _
  $region29: #{model_forward.22} parent=0 // pred_fallthru
    _

// kernel: model_forward.23
$region0: #{model_forward.23}
  #allocation0 [shape = 'u32[]', space=smem, size = 0x4, offset = 0x4, fixed_abs, tag = 'smem constant byte address 0x4 - core index']
  #allocation1 [shape = 'u32[144,128]{1,0:T(1,128)}', space=vmem, size = 0x12000, scoped, tag = 'internal scratch']
  #allocation2 [shape = 'f32[16,32]{1,0:T(8,128)}', space=vmem, size = 0x2000, scoped, tag = 'scratch operand']
  %s0 = inlined_call_operand.vmem [shape: bf16[16,64], index: 0, kind: input, shape index: {}]
  %s1 = inlined_call_operand.vmem [shape: bf16[64,32], index: 1, kind: input, shape index: {}]
  %s2 = inlined_call_operand.vmem [shape: f32[1,32], index: 2, kind: input, shape index: {}]
  %s3 = inlined_call_operand.vmem [shape: bf16[16,32], index: 3, kind: input, shape index: {}]
  %s4 = inlined_call_operand.vmem [shape: f32[1,32], index: 4, kind: input, shape index: {}]
  %s5 = inlined_call_operand.vmem [shape: f32[1,32], index: 5, kind: input, shape index: {}]
  %s6 = inlined_call_operand.vmem [shape: bf16[16,32], index: 6, kind: output, shape index: {}]
  %s7 = sld [smem:[#allocation0]]
  $region42: #{model_forward.23} parent=0
    _
  %s9 = ssub.s32 1, %s7
  %s10 = scalar_select 0, %s9, %s7
  // Predicated region
  $region2: #{model_forward.23} parent=0 // pred_check
    _
  $region3: #{model_forward.23} parent=0 // pred_check_branch
    %12 = sbr.rel (0) target = $region5
  $region4: #{model_forward.23} parent=0 // pred_region
    _
  $region5: #{model_forward.23} parent=0 // pred_fallthru
    _
  // Predicated region
  $region6: #{model_forward.23} parent=0 // pred_check
    _
  $region7: #{model_forward.23} parent=0 // pred_check_branch
    %14 = sbr.rel (0) target = $region9
  $region8: #{model_forward.23} parent=0 // pred_region
    _
  $region9: #{model_forward.23} parent=0 // pred_fallthru
    _
  // Predicated region
  $region10: #{model_forward.23} parent=0 // pred_check
    _
  $region11: #{model_forward.23} parent=0 // pred_check_branch
    %16 = sbr.rel (0) target = $region13
  $region12: #{model_forward.23} parent=0 // pred_region
    _
  $region13: #{model_forward.23} parent=0 // pred_fallthru
    _
  // Predicated region
  $region14: #{model_forward.23} parent=0 // pred_check
    _
  $region15: #{model_forward.23} parent=0 // pred_check_branch
    %18 = sbr.rel (0) target = $region17
  $region16: #{model_forward.23} parent=0 // pred_region
    _
  $region17: #{model_forward.23} parent=0 // pred_fallthru
    _
  // Predicated region
  $region18: #{model_forward.23} parent=0 // pred_check
    _
  $region19: #{model_forward.23} parent=0 // pred_check_branch
    %20 = sbr.rel (0) target = $region21
  $region20: #{model_forward.23} parent=0 // pred_region
    _
  $region21: #{model_forward.23} parent=0 // pred_fallthru
    _
  // Predicated region
  $region22: #{model_forward.23} parent=0 // pred_check
    _
  $region23: #{model_forward.23} parent=0 // pred_check_branch
    %22 = sbr.rel (0) target = $region25
  $region24: #{model_forward.23} parent=0 // pred_region
    _
  $region25: #{model_forward.23} parent=0 // pred_fallthru
    _
  %p24 = scmp.eq.s32.totalorder 0, 0
  // Predicated region
  $region26: #{model_forward.23} parent=0 // pred_check
    %p25 = pneg %p24
  $region27: #{model_forward.23} parent=0 // pred_check_branch
    %27 = sbr.rel (%p25) target = $region29
  $region28: #{model_forward.23} parent=0 // pred_region
    %vm28 = vcmask 261120
    %29 = vst.msk [vmem:[#allocation2] sm:$0xff] %vm28, 0.0
    %30 = vst.msk [vmem:[#allocation2 + $0x8] sm:$0xff] %vm28, 0.0
  $region29: #{model_forward.23} parent=0 // pred_fallthru
    _
  %v31 = vld [vmem:[#allocation2] sm:$0xff]
  %v32 = vld [vmem:[#allocation2 + $0x8] sm:$0xff]
  %v33 = vld [vmem:[%s0] sm:$0xf]
  %v34 = vld [vmem:[%s0 + $0x4] sm:$0xf]
  %v35 = vld [vmem:[%s1] sm:$0xf]
  %v36 = vld [vmem:[%s1 + $0x4] sm:$0xf]
  %v37 = vld [vmem:[%s1 + $0x8] sm:$0xf]
  %v38 = vld [vmem:[%s1 + $0xc] sm:$0xf]
  %v39 = vld [vmem:[%s1 + $0x10] sm:$0xf]
  %v40 = vld [vmem:[%s1 + $0x14] sm:$0xf]
  %v41 = vld [vmem:[%s1 + $0x18] sm:$0xf]
  %v42 = vld [vmem:[%s1 + $0x1c] sm:$0xf]
  %v45 = vunpack.c.l.b16 %v33
  %v46 = vunpack.c.l.b16 %v34
  %v47 = vpack.c.b16 %v46, %v45
  %v56 = vunpack.c.l.b16 %v35
  %v57 = vunpack.c.l.b16 %v36
  %v58 = vunpack.c.l.b16 %v37
  %v59 = vunpack.c.l.b16 %v38
  %v60 = vunpack.c.l.b16 %v39
  %v61 = vunpack.c.l.b16 %v40
  %v62 = vunpack.c.l.b16 %v41
  %v63 = vunpack.c.l.b16 %v42
  %v64 = vpack.c.b16 %v57, %v56
  %v65 = vpack.c.b16 %v59, %v58
  %v66 = vpack.c.b16 %v61, %v60
  %v67 = vpack.c.b16 %v63, %v62
  %vm72 = vcmask 523264
  %v74 = vsel %vm72, %v47, 0
  %76 = vmatprep.subr.bf16.mxu0 0
  %77 = vmatpush1.bf16.msra.mxu0 %v64
  %78 = vmatprep.subr.bf16.mxu0 0
  %79 = vmatpush1.bf16.msra.mxu0 %v65
  %80 = vmatprep.subr.bf16.mxu0 0
  %81 = vmatpush1.bf16.msra.mxu0 %v66
  %82 = vmatprep.subr.bf16.mxu0 0
  %83 = vmatpush1.bf16.msra.mxu0 %v67
  %84 = vmatprep.subr.bf16.mxu0 0
  %85 = vmatpush1.bf16.msra.mxu0 0
  %86 = vmatprep.subr.bf16.mxu0 0
  %87 = vmatpush1.bf16.msra.mxu0 0
  %88 = vmatprep.subr.bf16.mxu0 0
  %89 = vmatpush1.bf16.msra.mxu0 0
  %90 = vmatprep.subr.bf16.mxu0 0
  %91 = vmatpush1.bf16.msra.mxu0 0
  %92 = vmatprep.subr.bf16.mxu0 0
  %93 = vmatpush1.bf16.msra.mxu0 0
  %94 = vmatprep.subr.bf16.mxu0 0
  %95 = vmatpush1.bf16.msra.mxu0 0
  %96 = vmatprep.subr.bf16.mxu0 0
  %97 = vmatpush1.bf16.msra.mxu0 0
  %98 = vmatprep.subr.bf16.mxu0 0
  %99 = vmatpush1.bf16.msra.mxu0 0
  %100 = vmatprep.subr.bf16.mxu0 0
  %101 = vmatpush1.bf16.msra.mxu0 0
  %102 = vmatprep.subr.bf16.mxu0 0
  %103 = vmatpush1.bf16.msra.mxu0 0
  %104 = vmatprep.subr.bf16.mxu0 0
  %105 = vmatpush1.bf16.msra.mxu0 0
  %106 = vmatprep.subr.bf16.mxu0 0
  %107 = vmatpush1.bf16.msra.mxu0 0
  %108 = vmatprep.mubr.bf16.mxu0 0
  %109 = vmatmul.mubr.bf16.gmra.mrb[0].mxu0 %v74
  %v110 = vpop.f32.mrb[0].mxu0
  %v111 = vadd.f32 0.0, %v110
  %v112 = vpop.f32.mrb[0].mxu0
  %v113 = vpop.f32.mrb[0].mxu0
  %v114 = vadd.f32 0.0, %v113
  %v115 = vpop.f32.mrb[0].mxu0
  %116 = vdwg.mxu0
  %v117 = vadd.f32 %v31, %v111
  %v118 = vadd.f32 %v32, %v114
  %vm119 = vcmask 261120
  %120 = vst.msk [vmem:[#allocation2] sm:$0xff] %vm119, %v117
  %121 = vst.msk [vmem:[#allocation2 + $0x8] sm:$0xff] %vm119, %v118
  // Predicated region
  $region30: #{model_forward.23} parent=0 // pred_check
    %p122 = pneg %p24
  $region31: #{model_forward.23} parent=0 // pred_check_branch
    %124 = sbr.rel (%p122) target = $region33
  $region32: #{model_forward.23} parent=0 // pred_region
    %v125 = vld [vmem:[#allocation2] sm:$0xff]
    %v126 = vld [vmem:[#allocation2 + $0x8] sm:$0xff]
    %v127 = vld [vmem:[%s2] sm:$0x1]
    %v129 = vlaneseq
    %v130 = vshrl.u32 %v129, 7
    %v131 = vsub.s32 0, %v130
    %v132 = vrot.slane %v127, %v131
    %v134 = vadd.f32 %v125, %v132
    %v135 = vadd.f32 %v126, %v132
    %v136 = vld [vmem:[%s3] sm:$0xf]
    %v137 = vld [vmem:[%s3 + $0x4] sm:$0xf]
    %v138 = vunpack.c.l.bf16 %v136
    %v139 = vunpack.c.l.bf16 %v137
    %v140 = vadd.f32 %v134, %v138
    %v141 = vadd.f32 %v135, %v139
    %v142 = vsel %vm119, %v140, 0.0
    %143 = vadd.xlane.f32.xlu0 %v142
    %v144 = vpop.xlane.xlu0 %143
    %v145 = vsel %vm119, %v141, 0.0
    %146 = vadd.xlane.f32.xlu0 %v145
    %v147 = vpop.xlane.xlu0 %146
    %v148 = vrcp.pop 32.0
    %v149 = vmul.f32 %v144, %v148
    %v150 = vmul.f32 %v147, %v148
    %v151 = vsub.f32 %v140, %v149
    %v152 = vsub.f32 %v141, %v150
    %v153 = vmul.f32 %v151, %v151
    %v154 = vmul.f32 %v152, %v152
    %v155 = vsel %vm119, %v153, 0.0
    %156 = vadd.xlane.f32.xlu0 %v155
    %v157 = vpop.xlane.xlu0 %156
    %v158 = vsel %vm119, %v154, 0.0
    %159 = vadd.xlane.f32.xlu0 %v158
    %v160 = vpop.xlane.xlu0 %159
    %v161 = vmul.f32 %v157, %v148
    %v162 = vmul.f32 %v160, %v148
    %v163 = vadd.f32 %v161, 1e-05
    %v164 = vadd.f32 %v162, 1e-05
    %v165 = vrsqrt.pop %v163
    %v166 = vrsqrt.pop %v164
    %v167 = vmul.f32 %v151, %v165
    %v168 = vmul.f32 %v152, %v166
    %v169 = vld [vmem:[%s4] sm:$0x1]
    %v171 = vlaneseq
    %v172 = vshrl.u32 %v171, 7
    %v173 = vsub.s32 0, %v172
    %v174 = vrot.slane %v169, %v173
    %v176 = vmul.f32 %v167, %v174
    %v177 = vmul.f32 %v168, %v174
    %v178 = vld [vmem:[%s5] sm:$0x1]
    %v180 = vlaneseq
    %v181 = vshrl.u32 %v180, 7
    %v182 = vsub.s32 0, %v181
    %v183 = vrot.slane %v178, %v182
    %v185 = vadd.f32 %v176, %v183
    %v186 = vadd.f32 %v177, %v183
    %v187 = vpack.c.bf16 %v186, %v185
    %v189 = vunpack.c.l.b16 %v187
    %v190 = vunpack.c.h.b16 %v187
    %v191 = vpack.c.b16 %v189, %v189
    %v192 = vpack.c.b16 %v190, %v190
    %vm195 = vcmask 257024
    %196 = vst.msk [vmem:[%s6] sm:$0xf] %vm195, %v191
    %197 = vst.msk [vmem:[%s6 + $0x4] sm:$0xf] %vm195, %v192
  $region33: #{model_forward.23} parent=0 // pred_fallthru
    _
  // Predicated region
  $region34: #{model_forward.23} parent=0 // pred_check
    _
  $region35: #{model_forward.23} parent=0 // pred_check_branch
    %199 = sbr.rel (0) target = $region37
  $region36: #{model_forward.23} parent=0 // pred_region
    _
  $region37: #{model_forward.23} parent=0 // pred_fallthru
    _
  // Predicated region
  $region38: #{model_forward.23} parent=0 // pred_check
    _
  $region39: #{model_forward.23} parent=0 // pred_check_branch
    %201 = sbr.rel (0) target = $region41
  $region40: #{model_forward.23} parent=0 // pred_region
    _
  $region41: #{model_forward.23} parent=0 // pred_fallthru
    _

// kernel: model_forward.31
$region0: #{model_forward.31}
  #allocation0 [shape = 'u32[]', space=smem, size = 0x4, offset = 0x4, fixed_abs, tag = 'smem constant byte address 0x4 - core index']
  #allocation1 [shape = 'u32[144,128]{1,0:T(1,128)}', space=vmem, size = 0x12000, scoped, tag = 'internal scratch']
  #allocation2 [shape = 'f32[16,128]{1,0:T(8,128)}', space=vmem, size = 0x2000, scoped, tag = 'scratch operand']
  %s0 = inlined_call_operand.vmem [shape: bf16[16,32], index: 0, kind: input, shape index: {}]
  %s1 = inlined_call_operand.vmem [shape: bf16[32,128], index: 1, kind: input, shape index: {}]
  %s2 = inlined_call_operand.vmem [shape: f32[1,128], index: 2, kind: input, shape index: {}]
  %s3 = inlined_call_operand.vmem [shape: f32[16,128], index: 3, kind: output, shape index: {}]
  %s4 = sld [smem:[#allocation0]]
  $region30: #{model_forward.31} parent=0
    _
  %s6 = ssub.s32 1, %s4
  %s7 = scalar_select 0, %s6, %s4
  // Predicated region
  $region2: #{model_forward.31} parent=0 // pred_check
    _
  $region3: #{model_forward.31} parent=0 // pred_check_branch
    %9 = sbr.rel (0) target = $region5
  $region4: #{model_forward.31} parent=0 // pred_region
    _
  $region5: #{model_forward.31} parent=0 // pred_fallthru
    _
  // Predicated region
  $region6: #{model_forward.31} parent=0 // pred_check
    _
  $region7: #{model_forward.31} parent=0 // pred_check_branch
    %11 = sbr.rel (0) target = $region9
  $region8: #{model_forward.31} parent=0 // pred_region
    _
  $region9: #{model_forward.31} parent=0 // pred_fallthru
    _
  // Predicated region
  $region10: #{model_forward.31} parent=0 // pred_check
    _
  $region11: #{model_forward.31} parent=0 // pred_check_branch
    %13 = sbr.rel (0) target = $region13
  $region12: #{model_forward.31} parent=0 // pred_region
    _
  $region13: #{model_forward.31} parent=0 // pred_fallthru
    _
  %p15 = scmp.eq.s32.totalorder 0, 0
  // Predicated region
  $region14: #{model_forward.31} parent=0 // pred_check
    %p16 = pneg %p15
  $region15: #{model_forward.31} parent=0 // pred_check_branch
    %18 = sbr.rel (%p16) target = $region17
  $region16: #{model_forward.31} parent=0 // pred_region
    %19 = vst [vmem:[#allocation2] sm:$0xff] 0.0
    %20 = vst [vmem:[#allocation2 + $0x8] sm:$0xff] 0.0
  $region17: #{model_forward.31} parent=0 // pred_fallthru
    _
  %v21 = vld [vmem:[#allocation2] sm:$0xff]
  %v22 = vld [vmem:[#allocation2 + $0x8] sm:$0xff]
  %v23 = vld [vmem:[%s0] sm:$0xf]
  %v24 = vld [vmem:[%s0 + $0x4] sm:$0xf]
  %v25 = vld [vmem:[%s1] sm:$0xf]
  %v26 = vld [vmem:[%s1 + $0x4] sm:$0xf]
  %v27 = vld [vmem:[%s1 + $0x8] sm:$0xf]
  %v28 = vld [vmem:[%s1 + $0xc] sm:$0xf]
  %v31 = vunpack.c.l.b16 %v23
  %v32 = vunpack.c.l.b16 %v24
  %v33 = vpack.c.b16 %v32, %v31
  %v38 = vunpack.c.l.b16 %v25
  %v39 = vunpack.c.l.b16 %v26
  %v40 = vunpack.c.l.b16 %v27
  %v41 = vunpack.c.l.b16 %v28
  %v42 = vpack.c.b16 %v39, %v38
  %v43 = vpack.c.b16 %v41, %v40
  %vm46 = vcmask 261120
  %v48 = vsel %vm46, %v33, 0
  %50 = vmatprep.subr.bf16.mxu0 0
  %51 = vmatpush1.bf16.msra.mxu0 %v42
  %52 = vmatprep.subr.bf16.mxu0 0
  %53 = vmatpush1.bf16.msra.mxu0 %v43
  %54 = vmatprep.subr.bf16.mxu0 0
  %55 = vmatpush1.bf16.msra.mxu0 0
  %56 = vmatprep.subr.bf16.mxu0 0
  %57 = vmatpush1.bf16.msra.mxu0 0
  %58 = vmatprep.subr.bf16.mxu0 0
  %59 = vmatpush1.bf16.msra.mxu0 0
  %60 = vmatprep.subr.bf16.mxu0 0
  %61 = vmatpush1.bf16.msra.mxu0 0
  %62 = vmatprep.subr.bf16.mxu0 0
  %63 = vmatpush1.bf16.msra.mxu0 0
  %64 = vmatprep.subr.bf16.mxu0 0
  %65 = vmatpush1.bf16.msra.mxu0 0
  %66 = vmatprep.subr.bf16.mxu0 0
  %67 = vmatpush1.bf16.msra.mxu0 0
  %68 = vmatprep.subr.bf16.mxu0 0
  %69 = vmatpush1.bf16.msra.mxu0 0
  %70 = vmatprep.subr.bf16.mxu0 0
  %71 = vmatpush1.bf16.msra.mxu0 0
  %72 = vmatprep.subr.bf16.mxu0 0
  %73 = vmatpush1.bf16.msra.mxu0 0
  %74 = vmatprep.subr.bf16.mxu0 0
  %75 = vmatpush1.bf16.msra.mxu0 0
  %76 = vmatprep.subr.bf16.mxu0 0
  %77 = vmatpush1.bf16.msra.mxu0 0
  %78 = vmatprep.subr.bf16.mxu0 0
  %79 = vmatpush1.bf16.msra.mxu0 0
  %80 = vmatprep.subr.bf16.mxu0 0
  %81 = vmatpush1.bf16.msra.mxu0 0
  %82 = vmatprep.mubr.bf16.mxu0 0
  %83 = vmatmul.mubr.bf16.gmra.mrb[0].mxu0 %v48
  %v84 = vpop.f32.mrb[0].mxu0
  %v85 = vadd.f32 0.0, %v84
  %v86 = vpop.f32.mrb[0].mxu0
  %v87 = vpop.f32.mrb[0].mxu0
  %v88 = vadd.f32 0.0, %v87
  %v89 = vpop.f32.mrb[0].mxu0
  %90 = vdwg.mxu0
  %v91 = vadd.f32 %v21, %v85
  %v92 = vadd.f32 %v22, %v88
  %93 = vst [vmem:[#allocation2] sm:$0xff] %v91
  %94 = vst [vmem:[#allocation2 + $0x8] sm:$0xff] %v92
  // Predicated region
  $region18: #{model_forward.31} parent=0 // pred_check
    %p95 = pneg %p15
  $region19: #{model_forward.31} parent=0 // pred_check_branch
    %97 = sbr.rel (%p95) target = $region21
  $region20: #{model_forward.31} parent=0 // pred_region
    %v98 = vld [vmem:[#allocation2] sm:$0xff]
    %v99 = vld [vmem:[#allocation2 + $0x8] sm:$0xff]
    %v100 = vld [vmem:[%s2] sm:$0x1]
    %v102 = vlaneseq
    %v103 = vshrl.u32 %v102, 7
    %v104 = vsub.s32 0, %v103
    %v105 = vrot.slane %v100, %v104
    %v107 = vadd.f32 %v98, %v105
    %v108 = vadd.f32 %v99, %v105
    %109 = vst [vmem:[%s3] sm:$0xff] %v107
    %110 = vst [vmem:[%s3 + $0x8] sm:$0xff] %v108
  $region21: #{model_forward.31} parent=0 // pred_fallthru
    _
  // Predicated region
  $region22: #{model_forward.31} parent=0 // pred_check
    _
  $region23: #{model_forward.31} parent=0 // pred_check_branch
    %112 = sbr.rel (0) target = $region25
  $region24: #{model_forward.31} parent=0 // pred_region
    _
  $region25: #{model_forward.31} parent=0 // pred_fallthru
    _
  // Predicated region
  $region26: #{model_forward.31} parent=0 // pred_check
    _
  $region27: #{model_forward.31} parent=0 // pred_check_branch
    %114 = sbr.rel (0) target = $region29
  $region28: #{model_forward.31} parent=0 // pred_region
    _
  $region29: #{model_forward.31} parent=0 // pred_fallthru
    _

</llo_original>
